<compile_context>
chip_gen: v5e
topology: v5e:2x2
jax: 0.10.0
libtpu: 0.0.40
codegen_flags: <defaults>
</compile_context>

<pallas_src>
import math
import functools

import jax
import jax.numpy as jnp
import numpy as np
from jax.experimental import pallas as pl
from jax.experimental.pallas import tpu as pltpu

# ----------------------- model hyper-params (small) -----------------------
BATCH = 2
SEQ = 8            # decoder num_steps
ENC_SEQ = 8        # encoder sequence length
HIDDEN = 32        # num_hiddens
NUM_HEADS = 4
HEAD_DIM = HIDDEN // NUM_HEADS
FFN_HIDDEN = 64    # ffn_num_hiddens
NEG_INF = -1000000.0   # masked_softmax fill value used by the PyTorch code
LN_EPS = 1e-5


# ------------------------------ Pallas kernel ------------------------------
def decoder_block_kernel(enc_vl_ref,            # scalar prefetch (SMEM), (B,) int32
                         x_ref, enc_ref,        # (B*S, H), (B*Se, H)
                         attn_w_ref,            # (H, 8H): [wq1*s|wk1|wv1|wo1|wq2*s|wk2|wv2|wo2]
                         w1b1_ref,              # (H+1, F): [w1 ; b1]
                         w2b2_ref,              # (F+1, H): [w2 ; b2]
                         out_ref,               # (B*S, H)
                         *, B, S, Se, NH):
    H = x_ref.shape[-1]
    D = H // NH
    F = w1b1_ref.shape[-1]

    x2d = x_ref[...]                             # (B*S, H) f32
    enc2d = enc_ref[...]                         # (B*Se, H)

    # Static slices of the packed weight slabs (one DMA per slab, sliced in VMEM).
    attn_w = attn_w_ref[...]
    wqkv1 = attn_w[:, 0:3 * H]                   # fused Q|K|V, Q pre-scaled by 1/sqrt(D)
    wo1 = attn_w[:, 3 * H:4 * H]
    wq2 = attn_w[:, 4 * H:5 * H]                 # pre-scaled by 1/sqrt(D)
    wkv2 = attn_w[:, 5 * H:7 * H]                # fused K|V
    wo2 = attn_w[:, 7 * H:8 * H]

    w1b1 = w1b1_ref[...]
    w1, b1 = w1b1[:H, :], w1b1[H:, :]            # (H,F), (1,F)
    w2b2 = w2b2_ref[...]
    w2, b2 = w2b2[:F, :], w2b2[F:, :]            # (F,H), (1,H)

    def layer_norm(v):
        mu = jnp.mean(v, axis=-1, keepdims=True)
        c = v - mu
        var = jnp.mean(c * c, axis=-1, keepdims=True)
        return c * jax.lax.rsqrt(var + LN_EPS)

    def split_heads(t, n):
        # (B*n, H) -> (NH*B, n, D); row index = h*B + b.  Static lane slices +
        # major-axis concat only (no in-kernel transposes, no activation bcast).
        return jnp.concatenate(
            [t[:, h * D:(h + 1) * D].reshape(B, n, D) for h in range(NH)], axis=0)

    def merge_heads(o, n):
        # (NH*B, n, D) -> (B*n, H); hidden column = h*D + d (head concat).
        return jnp.concatenate(
            [o[h * B:(h + 1) * B].reshape(B * n, D) for h in range(NH)], axis=-1)

    def attention(q2d, k2d, v2d, mask, nq, nk):
        # q2d already includes the 1/sqrt(D) scale (folded into Wq in wrapper).
        qh = split_heads(q2d, nq)
        kh = split_heads(k2d, nk)
        vh = split_heads(v2d, nk)
        scores = jnp.einsum('bqd,bkd->bqk', qh, kh,
                            preferred_element_type=jnp.float32)     # (NH*B, nq, nk)
        scores = jnp.where(mask, scores, NEG_INF)
        m = jnp.max(scores, axis=-1, keepdims=True)
        e = jnp.exp(scores - m)
        p = e / jnp.sum(e, axis=-1, keepdims=True)                  # exact divide
        o = jnp.einsum('bqk,bkd->bqd', p, vh,
                       preferred_element_type=jnp.float32)          # (NH*B, nq, D)
        return merge_heads(o, nq)                                   # (B*nq, H)

    # --- attention1: masked self-attention (dec_valid_lens = 1..S -> causal) ---
    qkv1 = jnp.dot(x2d, wqkv1, preferred_element_type=jnp.float32)  # one wide MXU push
    q1, k1, v1 = qkv1[:, 0:H], qkv1[:, H:2 * H], qkv1[:, 2 * H:3 * H]

    qi = jax.lax.broadcasted_iota(jnp.int32, (S, S), 0)
    ki = jax.lax.broadcasted_iota(jnp.int32, (S, S), 1)
    causal_mask = ki <= qi                       # (S,S) broadcasts over heads/batch

    a1 = attention(q1, k1, v1, causal_mask, S, S)
    x2 = jnp.dot(a1, wo1, preferred_element_type=jnp.float32)       # single output proj
    y = layer_norm(x2d + x2)                                        # addnorm1

    # --- attention2: enc-dec attention, keys masked by enc_valid_lens[b] ---
    q2 = jnp.dot(y, wq2, preferred_element_type=jnp.float32)        # (B*S, H)
    kv2 = jnp.dot(enc2d, wkv2, preferred_element_type=jnp.float32)  # fused K|V (B*Se, 2H)
    k2, v2 = kv2[:, 0:H], kv2[:, H:2 * H]

    # Tiny head-free mask build: rows of the head-batched scores are h*B + b.
    kj = jax.lax.broadcasted_iota(jnp.int32, (NH * B, 1, Se), 2)
    bi = jax.lax.broadcasted_iota(jnp.int32, (NH * B, 1, Se), 0) % B
    vl = jnp.zeros((NH * B, 1, Se), jnp.int32)
    for b in range(B):                            # B is tiny and static
        vl = jnp.where(bi == b, enc_vl_ref[b], vl)
    enc_mask = kj < vl                            # (NH*B, 1, Se)

    a2 = attention(q2, k2, v2, enc_mask, S, Se)
    y2 = jnp.dot(a2, wo2, preferred_element_type=jnp.float32)
    z = layer_norm(y + y2)                                          # addnorm2

    # --- position-wise FFN + addnorm3 ---
    h1 = jnp.maximum(
        jnp.dot(z, w1, preferred_element_type=jnp.float32) + b1, 0.0)
    ffn = jnp.dot(h1, w2, preferred_element_type=jnp.float32) + b2
    out_ref[...] = layer_norm(z + ffn).astype(out_ref.dtype)        # addnorm3


# ------------------------------ wrapper ------------------------------
def transformer_decoder_block(X, enc_outputs, enc_valid_lens, params):
    B, S, H = X.shape
    Se = enc_outputs.shape[1]
    F = params["w1"].shape[1]
    NH = NUM_HEADS
    D = H // NH
    scale = 1.0 / math.sqrt(D)

    # Pack 12 weight/bias operands into 3 slabs (runs once, outside the kernel;
    # the 1/sqrt(D) score scale is folded into Wq here).
    attn_w = jnp.concatenate(
        [params["wq1"] * scale, params["wk1"], params["wv1"], params["wo1"],
         params["wq2"] * scale, params["wk2"], params["wv2"], params["wo2"]],
        axis=1)                                                     # (H, 8H)
    w1b1 = jnp.concatenate([params["w1"], params["b1"][None, :]], axis=0)   # (H+1, F)
    w2b2 = jnp.concatenate([params["w2"], params["b2"][None, :]], axis=0)   # (F+1, H)

    x2d = X.reshape(B * S, H)
    enc2d = enc_outputs.reshape(B * Se, H)

    def full(shape):
        return pl.BlockSpec(shape, lambda i, vl: (0,) * len(shape))

    grid_spec = pltpu.PrefetchScalarGridSpec(
        num_scalar_prefetch=1,                  # enc_valid_lens -> SMEM
        grid=(1,),                              # single invocation, single TensorCore
        in_specs=[full((B * S, H)), full((B * Se, H)),
                  full((H, 8 * H)), full((H + 1, F)), full((F + 1, H))],
        out_specs=full((B * S, H)),
    )

    kernel = functools.partial(decoder_block_kernel, B=B, S=S, Se=Se, NH=NH)
    out2d = pl.pallas_call(
        kernel,
        out_shape=jax.ShapeDtypeStruct((B * S, H), jnp.float32),
        grid_spec=grid_spec,
        compiler_params=pltpu.CompilerParams(
            dimension_semantics=("arbitrary",)),
    )(enc_valid_lens.astype(jnp.int32), x2d, enc2d, attn_w, w1b1, w2b2)
    return out2d.reshape(B, S, H)


# ------------------------------ pure-JAX reference ------------------------------
def ref_decoder_block(X, enc, enc_vl, p):
    B, S, H = X.shape
    NH, D = NUM_HEADS, HEAD_DIM
    hi = jax.lax.Precision.HIGHEST   # true-f32 matmuls (no bf16-pass truncation)

    def ln(v):
        mu = v.mean(-1, keepdims=True)
        c = v - mu
        var = (c * c).mean(-1, keepdims=True)
        return c * jax.lax.rsqrt(var + LN_EPS)

    def mha(q_in, kv_in, wq, wk, wv, wo, valid_rows):
        nq, nk = q_in.shape[1], kv_in.shape[1]
        q = jnp.einsum('bnh,hm->bnm', q_in, wq, precision=hi)
        k = jnp.einsum('bnh,hm->bnm', kv_in, wk, precision=hi)
        v = jnp.einsum('bnh,hm->bnm', kv_in, wv, precision=hi)

        def split(t):
            L = t.shape[1]
            return t.reshape(B, L, NH, D).transpose(0, 2, 1, 3).reshape(B * NH, L, D)

        qh, kh, vh = split(q), split(k), split(v)
        scores = jnp.einsum('bqd,bkd->bqk', qh, kh, precision=hi) / math.sqrt(D)
        mask = jnp.arange(nk)[None, None, :] < valid_rows[:, :, None]
        scores = jnp.where(mask, scores, NEG_INF)
        m = scores.max(-1, keepdims=True)
        e = jnp.exp(scores - m)
        attn = e / e.sum(-1, keepdims=True)
        o = jnp.einsum('bqk,bkd->bqd', attn, vh, precision=hi)
        o = o.reshape(B, NH, nq, D).transpose(0, 2, 1, 3).reshape(B, nq, H)
        return jnp.einsum('bnh,hm->bnm', o, wo, precision=hi)

    dec_vl = jnp.tile(jnp.arange(1, S + 1, dtype=jnp.int32)[None, :], (B, 1))
    dec_vl_h = jnp.repeat(dec_vl, NH, axis=0)                        # (B*NH, S)
    x2 = mha(X, X, p["wq1"], p["wk1"], p["wv1"], p["wo1"], dec_vl_h)
    y = ln(X + x2)

    enc_vl_h = jnp.broadcast_to(
        jnp.repeat(enc_vl, NH)[:, None], (B * NH, S))
    y2 = mha(y, enc, p["wq2"], p["wk2"], p["wv2"], p["wo2"], enc_vl_h)
    z = ln(y + y2)

    h1 = jnp.maximum(jnp.einsum('bnh,hf->bnf', z, p["w1"], precision=hi) + p["b1"], 0.0)
    ffn = jnp.einsum('bnf,fh->bnh', h1, p["w2"], precision=hi) + p["b2"]
    return ln(z + ffn)


# ------------------------------ parameter init ------------------------------
def make_linear_weight(in_dim, out_dim):
    # PyTorch Linear: y = x @ W.T ; W is all ones with W[0,0]=0.1,
    # so W.T is also all ones with [0,0]=0.1.
    w = jnp.ones((in_dim, out_dim), jnp.float32)
    return w.at[0, 0].set(0.1)


def make_params():
    p = {}
    for name in ("wq1", "wk1", "wv1", "wo1", "wq2", "wk2", "wv2", "wo2"):
        p[name] = make_linear_weight(HIDDEN, HIDDEN)
    p["w1"] = make_linear_weight(HIDDEN, FFN_HIDDEN)
    p["b1"] = jnp.zeros((FFN_HIDDEN,), jnp.float32)
    p["w2"] = make_linear_weight(FFN_HIDDEN, HIDDEN)
    p["b2"] = jnp.zeros((HIDDEN,), jnp.float32)
    return p


# ------------------------------ main ------------------------------
if __name__ == "__main__":
    key = jax.random.PRNGKey(0)
    kx, ke = jax.random.split(key)
    X = jax.random.normal(kx, (BATCH, SEQ, HIDDEN), jnp.float32)
    enc_outputs = jax.random.normal(ke, (BATCH, ENC_SEQ, HIDDEN), jnp.float32)
    enc_valid_lens = jnp.array([5, 8], dtype=jnp.int32)   # per-batch valid enc lens
    params = make_params()

    # TODO(synk): dropout layers are identity here (p=0.0); no stochastic path.
    # TODO(synk): only the first-call path (state[2][i] is None) is implemented;
    #             the incremental KV-cache concat branch is not.
    out = transformer_decoder_block(X, enc_outputs, enc_valid_lens, params)
    out = jax.block_until_ready(out)

    ref = jax.block_until_ready(ref_decoder_block(X, enc_outputs, enc_valid_lens, params))

    # Tolerance note: the hook init makes every Linear weight all-ones (except
    # [0,0]=0.1), so row-sums of layer-normed activations cancel to ~0 and the
    # attention2/FFN paths amplify f32 rounding/ordering differences between any
    # two valid implementations to the ~1e-3 level.  1e-2 is loose enough for
    # that inherent noise while still failing by O(1) on any structural bug
    # (wrong mask, wrong weights, missing residual, etc.).
    np.testing.assert_allclose(np.asarray(out), np.asarray(ref),
                               rtol=1e-2, atol=1e-2)
    print("KERNEL_OK")
</pallas_src>

<mosaic_0001>
module attributes {stable_mosaic.version = 11 : i64} {
  func.func @decoder_block_kernel(%arg0: i32, %arg1: memref<2xi32, #tpu.memory_space<smem>>, %arg2: memref<16x32xf32, #tpu.memory_space<vmem>>, %arg3: memref<16x32xf32, #tpu.memory_space<vmem>>, %arg4: memref<32x256xf32, #tpu.memory_space<vmem>>, %arg5: memref<33x64xf32, #tpu.memory_space<vmem>>, %arg6: memref<65x32xf32, #tpu.memory_space<vmem>>, %arg7: memref<16x32xf32, #tpu.memory_space<vmem>>) attributes {dimension_semantics = [#tpu.dimension_semantics<arbitrary>], iteration_bounds = array<i64: 1>, scalar_prefetch = 1 : i64, scratch_operands = 0 : i64, tpu.core_type = #tpu.core_type<tc>, window_params = [{pipeline_mode = #tpu.pipeline_mode<synchronous>, transform_indices = @transform_0, window_bounds = array<i64: 16, 32>}, {pipeline_mode = #tpu.pipeline_mode<synchronous>, transform_indices = @transform_1, window_bounds = array<i64: 16, 32>}, {pipeline_mode = #tpu.pipeline_mode<synchronous>, transform_indices = @transform_2, window_bounds = array<i64: 32, 256>}, {pipeline_mode = #tpu.pipeline_mode<synchronous>, transform_indices = @transform_3, window_bounds = array<i64: 33, 64>}, {pipeline_mode = #tpu.pipeline_mode<synchronous>, transform_indices = @transform_4, window_bounds = array<i64: 65, 32>}, {pipeline_mode = #tpu.pipeline_mode<synchronous>, transform_indices = @transform_5, window_bounds = array<i64: 16, 32>}]} {
    %c0 = arith.constant 0 : index
    %c0_0 = arith.constant 0 : index
    %0 = vector.load %arg2[%c0, %c0_0] : memref<16x32xf32, #tpu.memory_space<vmem>>, vector<16x32xf32>
    %c0_1 = arith.constant 0 : index
    %c0_2 = arith.constant 0 : index
    %1 = vector.load %arg3[%c0_1, %c0_2] : memref<16x32xf32, #tpu.memory_space<vmem>>, vector<16x32xf32>
    %c0_3 = arith.constant 0 : index
    %c0_4 = arith.constant 0 : index
    %2 = vector.load %arg4[%c0_3, %c0_4] : memref<32x256xf32, #tpu.memory_space<vmem>>, vector<32x256xf32>
    %3 = vector.extract_strided_slice %2 {offsets = [0, 0], sizes = [32, 96], strides = [1, 1]} : vector<32x256xf32> to vector<32x96xf32>
    %4 = vector.extract_strided_slice %2 {offsets = [0, 96], sizes = [32, 32], strides = [1, 1]} : vector<32x256xf32> to vector<32x32xf32>
    %5 = vector.extract_strided_slice %2 {offsets = [0, 128], sizes = [32, 32], strides = [1, 1]} : vector<32x256xf32> to vector<32x32xf32>
    %6 = vector.extract_strided_slice %2 {offsets = [0, 160], sizes = [32, 64], strides = [1, 1]} : vector<32x256xf32> to vector<32x64xf32>
    %7 = vector.extract_strided_slice %2 {offsets = [0, 224], sizes = [32, 32], strides = [1, 1]} : vector<32x256xf32> to vector<32x32xf32>
    %c0_5 = arith.constant 0 : index
    %c0_6 = arith.constant 0 : index
    %8 = vector.load %arg5[%c0_5, %c0_6] : memref<33x64xf32, #tpu.memory_space<vmem>>, vector<33x64xf32>
    %9 = vector.extract_strided_slice %8 {offsets = [0, 0], sizes = [32, 64], strides = [1, 1]} : vector<33x64xf32> to vector<32x64xf32>
    %10 = vector.extract_strided_slice %8 {offsets = [32, 0], sizes = [1, 64], strides = [1, 1]} : vector<33x64xf32> to vector<1x64xf32>
    %c0_7 = arith.constant 0 : index
    %c0_8 = arith.constant 0 : index
    %11 = vector.load %arg6[%c0_7, %c0_8] : memref<65x32xf32, #tpu.memory_space<vmem>>, vector<65x32xf32>
    %12 = vector.extract_strided_slice %11 {offsets = [0, 0], sizes = [64, 32], strides = [1, 1]} : vector<65x32xf32> to vector<64x32xf32>
    %13 = vector.extract_strided_slice %11 {offsets = [64, 0], sizes = [1, 32], strides = [1, 1]} : vector<65x32xf32> to vector<1x32xf32>
    %cst = arith.constant dense<0.000000e+00> : vector<16x96xf32>
    %14 = tpu.matmul %0, %3, %cst {dimension_numbers = #tpu.dot_dimension_numbers<[1], [0], [0], [1], [0, 0, 1, 1], [], []>} : vector<16x32xf32>, vector<32x96xf32>, vector<16x96xf32> -> vector<16x96xf32>
    %15 = vector.extract_strided_slice %14 {offsets = [0, 0], sizes = [16, 32], strides = [1, 1]} : vector<16x96xf32> to vector<16x32xf32>
    %16 = vector.extract_strided_slice %14 {offsets = [0, 32], sizes = [16, 32], strides = [1, 1]} : vector<16x96xf32> to vector<16x32xf32>
    %17 = vector.extract_strided_slice %14 {offsets = [0, 64], sizes = [16, 32], strides = [1, 1]} : vector<16x96xf32> to vector<16x32xf32>
    %18 = tpu.iota {dimensions = array<i32: 0>} : vector<8x8xi32>
    %19 = tpu.iota {dimensions = array<i32: 1>} : vector<8x8xi32>
    %20 = arith.cmpi sle, %19, %18 : vector<8x8xi32>
    %21 = vector.extract_strided_slice %15 {offsets = [0, 0], sizes = [16, 8], strides = [1, 1]} : vector<16x32xf32> to vector<16x8xf32>
    %22 = vector.shape_cast %21 : vector<16x8xf32> to vector<2x8x8xf32>
    %23 = vector.extract_strided_slice %15 {offsets = [0, 8], sizes = [16, 8], strides = [1, 1]} : vector<16x32xf32> to vector<16x8xf32>
    %24 = vector.shape_cast %23 : vector<16x8xf32> to vector<2x8x8xf32>
    %25 = vector.extract_strided_slice %15 {offsets = [0, 16], sizes = [16, 8], strides = [1, 1]} : vector<16x32xf32> to vector<16x8xf32>
    %26 = vector.shape_cast %25 : vector<16x8xf32> to vector<2x8x8xf32>
    %27 = vector.extract_strided_slice %15 {offsets = [0, 24], sizes = [16, 8], strides = [1, 1]} : vector<16x32xf32> to vector<16x8xf32>
    %28 = vector.shape_cast %27 : vector<16x8xf32> to vector<2x8x8xf32>
    %29 = tpu.concatenate %22, %24, %26, %28 in 0 : vector<2x8x8xf32>, vector<2x8x8xf32>, vector<2x8x8xf32>, vector<2x8x8xf32> -> vector<8x8x8xf32>
    %30 = vector.extract_strided_slice %16 {offsets = [0, 0], sizes = [16, 8], strides = [1, 1]} : vector<16x32xf32> to vector<16x8xf32>
    %31 = vector.shape_cast %30 : vector<16x8xf32> to vector<2x8x8xf32>
    %32 = vector.extract_strided_slice %16 {offsets = [0, 8], sizes = [16, 8], strides = [1, 1]} : vector<16x32xf32> to vector<16x8xf32>
    %33 = vector.shape_cast %32 : vector<16x8xf32> to vector<2x8x8xf32>
    %34 = vector.extract_strided_slice %16 {offsets = [0, 16], sizes = [16, 8], strides = [1, 1]} : vector<16x32xf32> to vector<16x8xf32>
    %35 = vector.shape_cast %34 : vector<16x8xf32> to vector<2x8x8xf32>
    %36 = vector.extract_strided_slice %16 {offsets = [0, 24], sizes = [16, 8], strides = [1, 1]} : vector<16x32xf32> to vector<16x8xf32>
    %37 = vector.shape_cast %36 : vector<16x8xf32> to vector<2x8x8xf32>
    %38 = tpu.concatenate %31, %33, %35, %37 in 0 : vector<2x8x8xf32>, vector<2x8x8xf32>, vector<2x8x8xf32>, vector<2x8x8xf32> -> vector<8x8x8xf32>
    %39 = vector.extract_strided_slice %17 {offsets = [0, 0], sizes = [16, 8], strides = [1, 1]} : vector<16x32xf32> to vector<16x8xf32>
    %40 = vector.shape_cast %39 : vector<16x8xf32> to vector<2x8x8xf32>
    %41 = vector.extract_strided_slice %17 {offsets = [0, 8], sizes = [16, 8], strides = [1, 1]} : vector<16x32xf32> to vector<16x8xf32>
    %42 = vector.shape_cast %41 : vector<16x8xf32> to vector<2x8x8xf32>
    %43 = vector.extract_strided_slice %17 {offsets = [0, 16], sizes = [16, 8], strides = [1, 1]} : vector<16x32xf32> to vector<16x8xf32>
    %44 = vector.shape_cast %43 : vector<16x8xf32> to vector<2x8x8xf32>
    %45 = vector.extract_strided_slice %17 {offsets = [0, 24], sizes = [16, 8], strides = [1, 1]} : vector<16x32xf32> to vector<16x8xf32>
    %46 = vector.shape_cast %45 : vector<16x8xf32> to vector<2x8x8xf32>
    %47 = tpu.concatenate %40, %42, %44, %46 in 0 : vector<2x8x8xf32>, vector<2x8x8xf32>, vector<2x8x8xf32>, vector<2x8x8xf32> -> vector<8x8x8xf32>
    "tpu.trace_start"() <{level = 10 : i32, message = "bqd,bkd->bqk"}> : () -> ()
    %cst_9 = arith.constant dense<0.000000e+00> : vector<8x8x8xf32>
    %48 = tpu.matmul %29, %38, %cst_9 {dimension_numbers = #tpu.dot_dimension_numbers<[2], [2], [1], [1], [0, 0, 0, 1, 1, 1], [0], [0]>} : vector<8x8x8xf32>, vector<8x8x8xf32>, vector<8x8x8xf32> -> vector<8x8x8xf32>
    %cst_10 = arith.constant -1.000000e+06 : f32
    "tpu.trace_stop"() : () -> ()
    %49 = vector.shape_cast %20 : vector<8x8xi1> to vector<1x8x8xi1>
    %50 = vector.broadcast %49 : vector<1x8x8xi1> to vector<8x8x8xi1>
    %51 = vector.broadcast %cst_10 : f32 to vector<8x8x8xf32>
    %52 = arith.select %50, %48, %51 : vector<8x8x8xi1>, vector<8x8x8xf32>
    %cst_11 = arith.constant dense<0xFF800000> : vector<8x8xf32>
    %53 = vector.multi_reduction <maximumf>, %52, %cst_11 [2] : vector<8x8x8xf32> to vector<8x8xf32>
    %54 = vector.shape_cast %53 : vector<8x8xf32> to vector<8x8x1xf32>
    %55 = vector.broadcast %54 : vector<8x8x1xf32> to vector<8x8x8xf32>
    %56 = arith.subf %52, %55 : vector<8x8x8xf32>
    %57 = math.exp %56 : vector<8x8x8xf32>
    %cst_12 = arith.constant dense<0.000000e+00> : vector<8x8xf32>
    %58 = vector.multi_reduction <add>, %57, %cst_12 [2] : vector<8x8x8xf32> to vector<8x8xf32>
    %59 = vector.shape_cast %58 : vector<8x8xf32> to vector<8x8x1xf32>
    %60 = vector.broadcast %59 : vector<8x8x1xf32> to vector<8x8x8xf32>
    %61 = arith.divf %57, %60 : vector<8x8x8xf32>
    "tpu.trace_start"() <{level = 10 : i32, message = "bqk,bkd->bqd"}> : () -> ()
    %cst_13 = arith.constant dense<0.000000e+00> : vector<8x8x8xf32>
    %62 = tpu.matmul %61, %47, %cst_13 {dimension_numbers = #tpu.dot_dimension_numbers<[2], [1], [1], [2], [0, 0, 0, 1, 1, 2], [0], [0]>} : vector<8x8x8xf32>, vector<8x8x8xf32>, vector<8x8x8xf32> -> vector<8x8x8xf32>
    "tpu.trace_stop"() : () -> ()
    %63 = vector.extract_strided_slice %62 {offsets = [0, 0, 0], sizes = [2, 8, 8], strides = [1, 1, 1]} : vector<8x8x8xf32> to vector<2x8x8xf32>
    %64 = vector.shape_cast %63 : vector<2x8x8xf32> to vector<16x8xf32>
    %65 = vector.extract_strided_slice %62 {offsets = [2, 0, 0], sizes = [2, 8, 8], strides = [1, 1, 1]} : vector<8x8x8xf32> to vector<2x8x8xf32>
    %66 = vector.shape_cast %65 : vector<2x8x8xf32> to vector<16x8xf32>
    %67 = vector.extract_strided_slice %62 {offsets = [4, 0, 0], sizes = [2, 8, 8], strides = [1, 1, 1]} : vector<8x8x8xf32> to vector<2x8x8xf32>
    %68 = vector.shape_cast %67 : vector<2x8x8xf32> to vector<16x8xf32>
    %69 = vector.extract_strided_slice %62 {offsets = [6, 0, 0], sizes = [2, 8, 8], strides = [1, 1, 1]} : vector<8x8x8xf32> to vector<2x8x8xf32>
    %70 = vector.shape_cast %69 : vector<2x8x8xf32> to vector<16x8xf32>
    %71 = tpu.concatenate %64, %66, %68, %70 in 1 : vector<16x8xf32>, vector<16x8xf32>, vector<16x8xf32>, vector<16x8xf32> -> vector<16x32xf32>
    %cst_14 = arith.constant dense<0.000000e+00> : vector<16x32xf32>
    %72 = tpu.matmul %71, %4, %cst_14 {dimension_numbers = #tpu.dot_dimension_numbers<[1], [0], [0], [1], [0, 0, 1, 1], [], []>} : vector<16x32xf32>, vector<32x32xf32>, vector<16x32xf32> -> vector<16x32xf32>
    %73 = arith.addf %0, %72 : vector<16x32xf32>
    %cst_15 = arith.constant dense<0.000000e+00> : vector<16xf32>
    %74 = vector.multi_reduction <add>, %73, %cst_15 [1] : vector<16x32xf32> to vector<16xf32>
    %75 = vector.shape_cast %74 : vector<16xf32> to vector<16x1xf32>
    %cst_16 = arith.constant 3.200000e+01 : f32
    %76 = vector.broadcast %cst_16 : f32 to vector<16x1xf32>
    %77 = arith.divf %75, %76 : vector<16x1xf32>
    %78 = vector.broadcast %77 : vector<16x1xf32> to vector<16x32xf32>
    %79 = arith.subf %73, %78 : vector<16x32xf32>
    %80 = arith.mulf %79, %79 : vector<16x32xf32>
    %cst_17 = arith.constant dense<0.000000e+00> : vector<16xf32>
    %81 = vector.multi_reduction <add>, %80, %cst_17 [1] : vector<16x32xf32> to vector<16xf32>
    %82 = vector.shape_cast %81 : vector<16xf32> to vector<16x1xf32>
    %cst_18 = arith.constant 3.200000e+01 : f32
    %83 = vector.broadcast %cst_18 : f32 to vector<16x1xf32>
    %84 = arith.divf %82, %83 : vector<16x1xf32>
    %cst_19 = arith.constant 9.99999974E-6 : f32
    %85 = vector.broadcast %cst_19 : f32 to vector<16x1xf32>
    %86 = arith.addf %84, %85 : vector<16x1xf32>
    %87 = math.rsqrt %86 : vector<16x1xf32>
    %88 = vector.broadcast %87 : vector<16x1xf32> to vector<16x32xf32>
    %89 = arith.mulf %79, %88 : vector<16x32xf32>
    %cst_20 = arith.constant dense<0.000000e+00> : vector<16x32xf32>
    %90 = tpu.matmul %89, %5, %cst_20 {dimension_numbers = #tpu.dot_dimension_numbers<[1], [0], [0], [1], [0, 0, 1, 1], [], []>} : vector<16x32xf32>, vector<32x32xf32>, vector<16x32xf32> -> vector<16x32xf32>
    %cst_21 = arith.constant dense<0.000000e+00> : vector<16x64xf32>
    %91 = tpu.matmul %1, %6, %cst_21 {dimension_numbers = #tpu.dot_dimension_numbers<[1], [0], [0], [1], [0, 0, 1, 1], [], []>} : vector<16x32xf32>, vector<32x64xf32>, vector<16x64xf32> -> vector<16x64xf32>
    %92 = vector.extract_strided_slice %91 {offsets = [0, 0], sizes = [16, 32], strides = [1, 1]} : vector<16x64xf32> to vector<16x32xf32>
    %93 = vector.extract_strided_slice %91 {offsets = [0, 32], sizes = [16, 32], strides = [1, 1]} : vector<16x64xf32> to vector<16x32xf32>
    %94 = tpu.iota {dimensions = array<i32: 2>} : vector<8x1x8xi32>
    %95 = tpu.iota {dimensions = array<i32: 0>} : vector<8x1x8xi32>
    %c2_i32 = arith.constant 2 : i32
    %c0_i32 = arith.constant 0 : i32
    %96 = arith.cmpi eq, %c2_i32, %c0_i32 : i32
    %c1_i32 = arith.constant 1 : i32
    %97 = arith.select %96, %c1_i32, %c2_i32 : i32
    %98 = vector.broadcast %97 : i32 to vector<8x1x8xi32>
    %99 = arith.remsi %95, %98 : vector<8x1x8xi32>
    %c0_i32_22 = arith.constant 0 : i32
    %100 = vector.broadcast %c0_i32_22 : i32 to vector<8x1x8xi32>
    %101 = arith.cmpi ne, %99, %100 : vector<8x1x8xi32>
    %c0_i32_23 = arith.constant 0 : i32
    %102 = vector.broadcast %c0_i32_23 : i32 to vector<8x1x8xi32>
    %103 = arith.cmpi slt, %99, %102 : vector<8x1x8xi32>
    %c0_i32_24 = arith.constant 0 : i32
    %104 = arith.cmpi slt, %97, %c0_i32_24 : i32
    %105 = vector.broadcast %104 : i1 to vector<8x1x8xi1>
    %106 = vector.broadcast %105 : vector<8x1x8xi1> to vector<8x1x8xi1>
    %107 = arith.xori %103, %106 : vector<8x1x8xi1>
    %108 = arith.andi %107, %101 : vector<8x1x8xi1>
    %109 = vector.broadcast %97 : i32 to vector<8x1x8xi32>
    %110 = arith.addi %99, %109 : vector<8x1x8xi32>
    %111 = arith.select %108, %110, %99 : vector<8x1x8xi1>, vector<8x1x8xi32>
    %c0_i32_25 = arith.constant 0 : i32
    %112 = vector.broadcast %c0_i32_25 : i32 to vector<8x1x8xi32>
    %c0_i32_26 = arith.constant 0 : i32
    %113 = vector.broadcast %c0_i32_26 : i32 to vector<8x1x8xi32>
    %114 = arith.cmpi eq, %111, %113 : vector<8x1x8xi32>
    %c0_27 = arith.constant 0 : index
    %115 = memref.load %arg1[%c0_27] : memref<2xi32, #tpu.memory_space<smem>>
    %116 = vector.broadcast %115 : i32 to vector<8x1x8xi32>
    %117 = arith.select %114, %116, %112 : vector<8x1x8xi1>, vector<8x1x8xi32>
    %c1_i32_28 = arith.constant 1 : i32
    %118 = vector.broadcast %c1_i32_28 : i32 to vector<8x1x8xi32>
    %119 = arith.cmpi eq, %111, %118 : vector<8x1x8xi32>
    %c1 = arith.constant 1 : index
    %120 = memref.load %arg1[%c1] : memref<2xi32, #tpu.memory_space<smem>>
    %121 = vector.broadcast %120 : i32 to vector<8x1x8xi32>
    %122 = arith.select %119, %121, %117 : vector<8x1x8xi1>, vector<8x1x8xi32>
    %123 = arith.cmpi slt, %94, %122 : vector<8x1x8xi32>
    %124 = vector.extract_strided_slice %90 {offsets = [0, 0], sizes = [16, 8], strides = [1, 1]} : vector<16x32xf32> to vector<16x8xf32>
    %125 = vector.shape_cast %124 : vector<16x8xf32> to vector<2x8x8xf32>
    %126 = vector.extract_strided_slice %90 {offsets = [0, 8], sizes = [16, 8], strides = [1, 1]} : vector<16x32xf32> to vector<16x8xf32>
    %127 = vector.shape_cast %126 : vector<16x8xf32> to vector<2x8x8xf32>
    %128 = vector.extract_strided_slice %90 {offsets = [0, 16], sizes = [16, 8], strides = [1, 1]} : vector<16x32xf32> to vector<16x8xf32>
    %129 = vector.shape_cast %128 : vector<16x8xf32> to vector<2x8x8xf32>
    %130 = vector.extract_strided_slice %90 {offsets = [0, 24], sizes = [16, 8], strides = [1, 1]} : vector<16x32xf32> to vector<16x8xf32>
    %131 = vector.shape_cast %130 : vector<16x8xf32> to vector<2x8x8xf32>
    %132 = tpu.concatenate %125, %127, %129, %131 in 0 : vector<2x8x8xf32>, vector<2x8x8xf32>, vector<2x8x8xf32>, vector<2x8x8xf32> -> vector<8x8x8xf32>
    %133 = vector.extract_strided_slice %92 {offsets = [0, 0], sizes = [16, 8], strides = [1, 1]} : vector<16x32xf32> to vector<16x8xf32>
    %134 = vector.shape_cast %133 : vector<16x8xf32> to vector<2x8x8xf32>
    %135 = vector.extract_strided_slice %92 {offsets = [0, 8], sizes = [16, 8], strides = [1, 1]} : vector<16x32xf32> to vector<16x8xf32>
    %136 = vector.shape_cast %135 : vector<16x8xf32> to vector<2x8x8xf32>
    %137 = vector.extract_strided_slice %92 {offsets = [0, 16], sizes = [16, 8], strides = [1, 1]} : vector<16x32xf32> to vector<16x8xf32>
    %138 = vector.shape_cast %137 : vector<16x8xf32> to vector<2x8x8xf32>
    %139 = vector.extract_strided_slice %92 {offsets = [0, 24], sizes = [16, 8], strides = [1, 1]} : vector<16x32xf32> to vector<16x8xf32>
    %140 = vector.shape_cast %139 : vector<16x8xf32> to vector<2x8x8xf32>
    %141 = tpu.concatenate %134, %136, %138, %140 in 0 : vector<2x8x8xf32>, vector<2x8x8xf32>, vector<2x8x8xf32>, vector<2x8x8xf32> -> vector<8x8x8xf32>
    %142 = vector.extract_strided_slice %93 {offsets = [0, 0], sizes = [16, 8], strides = [1, 1]} : vector<16x32xf32> to vector<16x8xf32>
    %143 = vector.shape_cast %142 : vector<16x8xf32> to vector<2x8x8xf32>
    %144 = vector.extract_strided_slice %93 {offsets = [0, 8], sizes = [16, 8], strides = [1, 1]} : vector<16x32xf32> to vector<16x8xf32>
    %145 = vector.shape_cast %144 : vector<16x8xf32> to vector<2x8x8xf32>
    %146 = vector.extract_strided_slice %93 {offsets = [0, 16], sizes = [16, 8], strides = [1, 1]} : vector<16x32xf32> to vector<16x8xf32>
    %147 = vector.shape_cast %146 : vector<16x8xf32> to vector<2x8x8xf32>
    %148 = vector.extract_strided_slice %93 {offsets = [0, 24], sizes = [16, 8], strides = [1, 1]} : vector<16x32xf32> to vector<16x8xf32>
    %149 = vector.shape_cast %148 : vector<16x8xf32> to vector<2x8x8xf32>
    %150 = tpu.concatenate %143, %145, %147, %149 in 0 : vector<2x8x8xf32>, vector<2x8x8xf32>, vector<2x8x8xf32>, vector<2x8x8xf32> -> vector<8x8x8xf32>
    "tpu.trace_start"() <{level = 10 : i32, message = "bqd,bkd->bqk"}> : () -> ()
    %cst_29 = arith.constant dense<0.000000e+00> : vector<8x8x8xf32>
    %151 = tpu.matmul %132, %141, %cst_29 {dimension_numbers = #tpu.dot_dimension_numbers<[2], [2], [1], [1], [0, 0, 0, 1, 1, 1], [0], [0]>} : vector<8x8x8xf32>, vector<8x8x8xf32>, vector<8x8x8xf32> -> vector<8x8x8xf32>
    %cst_30 = arith.constant -1.000000e+06 : f32
    "tpu.trace_stop"() : () -> ()
    %152 = vector.shape_cast %123 : vector<8x1x8xi1> to vector<8x1x8xi1>
    %153 = vector.broadcast %152 : vector<8x1x8xi1> to vector<8x8x8xi1>
    %154 = vector.broadcast %cst_30 : f32 to vector<8x8x8xf32>
    %155 = arith.select %153, %151, %154 : vector<8x8x8xi1>, vector<8x8x8xf32>
    %cst_31 = arith.constant dense<0xFF800000> : vector<8x8xf32>
    %156 = vector.multi_reduction <maximumf>, %155, %cst_31 [2] : vector<8x8x8xf32> to vector<8x8xf32>
    %157 = vector.shape_cast %156 : vector<8x8xf32> to vector<8x8x1xf32>
    %158 = vector.broadcast %157 : vector<8x8x1xf32> to vector<8x8x8xf32>
    %159 = arith.subf %155, %158 : vector<8x8x8xf32>
    %160 = math.exp %159 : vector<8x8x8xf32>
    %cst_32 = arith.constant dense<0.000000e+00> : vector<8x8xf32>
    %161 = vector.multi_reduction <add>, %160, %cst_32 [2] : vector<8x8x8xf32> to vector<8x8xf32>
    %162 = vector.shape_cast %161 : vector<8x8xf32> to vector<8x8x1xf32>
    %163 = vector.broadcast %162 : vector<8x8x1xf32> to vector<8x8x8xf32>
    %164 = arith.divf %160, %163 : vector<8x8x8xf32>
    "tpu.trace_start"() <{level = 10 : i32, message = "bqk,bkd->bqd"}> : () -> ()
    %cst_33 = arith.constant dense<0.000000e+00> : vector<8x8x8xf32>
    %165 = tpu.matmul %164, %150, %cst_33 {dimension_numbers = #tpu.dot_dimension_numbers<[2], [1], [1], [2], [0, 0, 0, 1, 1, 2], [0], [0]>} : vector<8x8x8xf32>, vector<8x8x8xf32>, vector<8x8x8xf32> -> vector<8x8x8xf32>
    "tpu.trace_stop"() : () -> ()
    %166 = vector.extract_strided_slice %165 {offsets = [0, 0, 0], sizes = [2, 8, 8], strides = [1, 1, 1]} : vector<8x8x8xf32> to vector<2x8x8xf32>
    %167 = vector.shape_cast %166 : vector<2x8x8xf32> to vector<16x8xf32>
    %168 = vector.extract_strided_slice %165 {offsets = [2, 0, 0], sizes = [2, 8, 8], strides = [1, 1, 1]} : vector<8x8x8xf32> to vector<2x8x8xf32>
    %169 = vector.shape_cast %168 : vector<2x8x8xf32> to vector<16x8xf32>
    %170 = vector.extract_strided_slice %165 {offsets = [4, 0, 0], sizes = [2, 8, 8], strides = [1, 1, 1]} : vector<8x8x8xf32> to vector<2x8x8xf32>
    %171 = vector.shape_cast %170 : vector<2x8x8xf32> to vector<16x8xf32>
    %172 = vector.extract_strided_slice %165 {offsets = [6, 0, 0], sizes = [2, 8, 8], strides = [1, 1, 1]} : vector<8x8x8xf32> to vector<2x8x8xf32>
    %173 = vector.shape_cast %172 : vector<2x8x8xf32> to vector<16x8xf32>
    %174 = tpu.concatenate %167, %169, %171, %173 in 1 : vector<16x8xf32>, vector<16x8xf32>, vector<16x8xf32>, vector<16x8xf32> -> vector<16x32xf32>
    %cst_34 = arith.constant dense<0.000000e+00> : vector<16x32xf32>
    %175 = tpu.matmul %174, %7, %cst_34 {dimension_numbers = #tpu.dot_dimension_numbers<[1], [0], [0], [1], [0, 0, 1, 1], [], []>} : vector<16x32xf32>, vector<32x32xf32>, vector<16x32xf32> -> vector<16x32xf32>
    %176 = arith.addf %89, %175 : vector<16x32xf32>
    %cst_35 = arith.constant dense<0.000000e+00> : vector<16xf32>
    %177 = vector.multi_reduction <add>, %176, %cst_35 [1] : vector<16x32xf32> to vector<16xf32>
    %178 = vector.shape_cast %177 : vector<16xf32> to vector<16x1xf32>
    %cst_36 = arith.constant 3.200000e+01 : f32
    %179 = vector.broadcast %cst_36 : f32 to vector<16x1xf32>
    %180 = arith.divf %178, %179 : vector<16x1xf32>
    %181 = vector.broadcast %180 : vector<16x1xf32> to vector<16x32xf32>
    %182 = arith.subf %176, %181 : vector<16x32xf32>
    %183 = arith.mulf %182, %182 : vector<16x32xf32>
    %cst_37 = arith.constant dense<0.000000e+00> : vector<16xf32>
    %184 = vector.multi_reduction <add>, %183, %cst_37 [1] : vector<16x32xf32> to vector<16xf32>
    %185 = vector.shape_cast %184 : vector<16xf32> to vector<16x1xf32>
    %cst_38 = arith.constant 3.200000e+01 : f32
    %186 = vector.broadcast %cst_38 : f32 to vector<16x1xf32>
    %187 = arith.divf %185, %186 : vector<16x1xf32>
    %cst_39 = arith.constant 9.99999974E-6 : f32
    %188 = vector.broadcast %cst_39 : f32 to vector<16x1xf32>
    %189 = arith.addf %187, %188 : vector<16x1xf32>
    %190 = math.rsqrt %189 : vector<16x1xf32>
    %191 = vector.broadcast %190 : vector<16x1xf32> to vector<16x32xf32>
    %192 = arith.mulf %182, %191 : vector<16x32xf32>
    %cst_40 = arith.constant dense<0.000000e+00> : vector<16x64xf32>
    %193 = tpu.matmul %192, %9, %cst_40 {dimension_numbers = #tpu.dot_dimension_numbers<[1], [0], [0], [1], [0, 0, 1, 1], [], []>} : vector<16x32xf32>, vector<32x64xf32>, vector<16x64xf32> -> vector<16x64xf32>
    %194 = vector.broadcast %10 : vector<1x64xf32> to vector<16x64xf32>
    %195 = arith.addf %193, %194 : vector<16x64xf32>
    %cst_41 = arith.constant 0.000000e+00 : f32
    %196 = vector.broadcast %cst_41 : f32 to vector<16x64xf32>
    %197 = arith.maximumf %195, %196 : vector<16x64xf32>
    %cst_42 = arith.constant dense<0.000000e+00> : vector<16x32xf32>
    %198 = tpu.matmul %197, %12, %cst_42 {dimension_numbers = #tpu.dot_dimension_numbers<[1], [0], [0], [1], [0, 0, 1, 1], [], []>} : vector<16x64xf32>, vector<64x32xf32>, vector<16x32xf32> -> vector<16x32xf32>
    %199 = vector.broadcast %13 : vector<1x32xf32> to vector<16x32xf32>
    %200 = arith.addf %198, %199 : vector<16x32xf32>
    %201 = arith.addf %192, %200 : vector<16x32xf32>
    %cst_43 = arith.constant dense<0.000000e+00> : vector<16xf32>
    %202 = vector.multi_reduction <add>, %201, %cst_43 [1] : vector<16x32xf32> to vector<16xf32>
    %203 = vector.shape_cast %202 : vector<16xf32> to vector<16x1xf32>
    %cst_44 = arith.constant 3.200000e+01 : f32
    %204 = vector.broadcast %cst_44 : f32 to vector<16x1xf32>
    %205 = arith.divf %203, %204 : vector<16x1xf32>
    %206 = vector.broadcast %205 : vector<16x1xf32> to vector<16x32xf32>
    %207 = arith.subf %201, %206 : vector<16x32xf32>
    %208 = arith.mulf %207, %207 : vector<16x32xf32>
    %cst_45 = arith.constant dense<0.000000e+00> : vector<16xf32>
    %209 = vector.multi_reduction <add>, %208, %cst_45 [1] : vector<16x32xf32> to vector<16xf32>
    %210 = vector.shape_cast %209 : vector<16xf32> to vector<16x1xf32>
    %cst_46 = arith.constant 3.200000e+01 : f32
    %211 = vector.broadcast %cst_46 : f32 to vector<16x1xf32>
    %212 = arith.divf %210, %211 : vector<16x1xf32>
    %cst_47 = arith.constant 9.99999974E-6 : f32
    %213 = vector.broadcast %cst_47 : f32 to vector<16x1xf32>
    %214 = arith.addf %212, %213 : vector<16x1xf32>
    %215 = math.rsqrt %214 : vector<16x1xf32>
    %216 = vector.broadcast %215 : vector<16x1xf32> to vector<16x32xf32>
    %217 = arith.mulf %207, %216 : vector<16x32xf32>
    %c0_48 = arith.constant 0 : index
    %c0_49 = arith.constant 0 : index
    %218 = vector.load %arg7[%c0_48, %c0_49] : memref<16x32xf32, #tpu.memory_space<vmem>>, vector<16x32xf32>
    tpu.vector_store %arg7[%c0_48, %c0_49], %217 {strides = array<i32>} : memref<16x32xf32, #tpu.memory_space<vmem>>, vector<16x32xf32>,
    return
  }
  func.func @transform_0(%arg0: i32, %arg1: memref<2xi32, #tpu.memory_space<smem>>) -> (i32, i32) {
    %c0_i32 = arith.constant 0 : i32
    %c0_i32_0 = arith.constant 0 : i32
    %c0_i32_1 = arith.constant 0 : i32
    return %c0_i32, %c0_i32_0 : i32, i32
  }
  func.func @transform_1(%arg0: i32, %arg1: memref<2xi32, #tpu.memory_space<smem>>) -> (i32, i32) {
    %c0_i32 = arith.constant 0 : i32
    %c0_i32_0 = arith.constant 0 : i32
    %c0_i32_1 = arith.constant 0 : i32
    return %c0_i32, %c0_i32_0 : i32, i32
  }
  func.func @transform_2(%arg0: i32, %arg1: memref<2xi32, #tpu.memory_space<smem>>) -> (i32, i32) {
    %c0_i32 = arith.constant 0 : i32
    %c0_i32_0 = arith.constant 0 : i32
    %c0_i32_1 = arith.constant 0 : i32
    return %c0_i32, %c0_i32_0 : i32, i32
  }
  func.func @transform_3(%arg0: i32, %arg1: memref<2xi32, #tpu.memory_space<smem>>) -> (i32, i32) {
    %c0_i32 = arith.constant 0 : i32
    %c0_i32_0 = arith.constant 0 : i32
    %c0_i32_1 = arith.constant 0 : i32
    return %c0_i32, %c0_i32_0 : i32, i32
  }
  func.func @transform_4(%arg0: i32, %arg1: memref<2xi32, #tpu.memory_space<smem>>) -> (i32, i32) {
    %c0_i32 = arith.constant 0 : i32
    %c0_i32_0 = arith.constant 0 : i32
    %c0_i32_1 = arith.constant 0 : i32
    return %c0_i32, %c0_i32_0 : i32, i32
  }
  func.func @transform_5(%arg0: i32, %arg1: memref<2xi32, #tpu.memory_space<smem>>) -> (i32, i32) {
    %c0_i32 = arith.constant 0 : i32
    %c0_i32_0 = arith.constant 0 : i32
    %c0_i32_1 = arith.constant 0 : i32
    return %c0_i32, %c0_i32_0 : i32, i32
  }
}

</mosaic_0001>

<llo_original>
// kernel: tpu_custom_call.1
$region0: #{tpu_custom_call.1}
  #allocation0 [shape = 'u32[]', space=smem, size = 0x4, offset = 0x4, fixed_abs, tag = 'smem constant byte address 0x4 - core index']
  #allocation1 [shape = 'u32[72,128]{1,0:T(1,128)}', space=vmem, size = 0x9000, scoped, tag = 'internal scratch']
  #allocation2 [shape = 's32[1]{0}', space=sflag, size = 0x4, scoped, tag = 'scoped memory for tpu_custom_call.1']
  #allocation3 [shape = 'u8[512]{0}', space=smem, size = 0x200, scoped, tag = 'prefetched SMEM operand 0']
  %s0 = inlined_call_operand.vmem [shape: s32[2], index: 0, kind: input, shape index: {}]
  %s1 = inlined_call_operand.hbm [shape: f32[16,32], index: 1, kind: input, shape index: {}]
  %s2 = inlined_call_operand.hbm [shape: f32[16,32], index: 2, kind: input, shape index: {}]
  %s3 = inlined_call_operand.vmem [shape: f32[32,256], index: 3, kind: input, shape index: {}]
  %s4 = inlined_call_operand.vmem [shape: f32[33,64], index: 4, kind: input, shape index: {}]
  %s5 = inlined_call_operand.vmem [shape: f32[65,32], index: 5, kind: input, shape index: {}]
  %s6 = inlined_call_operand.hbm [shape: f32[16,32], index: 6, kind: output, shape index: {}]
  %s7 = sld [smem:[#allocation0]]
  $region38: #{tpu_custom_call.1} parent=0
    _
  %s9 = ssub.s32 1, %s7
  %s10 = scalar_select 0, %s9, %s7
  %s12 = sshll.u32 %s0, 4
  %s13 = int_to_ptr.vmem [resolvable:$true] %s12
  %15 = dma.vmem_to_smem %s13, 16, [#allocation3], [#allocation2]
  %17 = dma.done [#allocation2], 16
  %18 = sfence
  $region1: #{tpu_custom_call.1} parent=0
    #allocation4 [shape = 'u8[8192]{0}', space=vmem, size = 0x2000, scoped, tag = 'input window, operand 1, single buffered']
    #allocation5 [shape = 's32[1]{0}', space=sflag, size = 0x4, scoped, tag = 'scoped memory for tpu_custom_call.1']
    #allocation6 [shape = 's32[1]{0}', space=sflag, size = 0x4, scoped, tag = 'scoped memory for tpu_custom_call.1']
    #allocation7 [shape = 'u8[8192]{0}', space=vmem, size = 0x2000, scoped, tag = 'input window, operand 2, single buffered']
    #allocation8 [shape = 's32[1]{0}', space=sflag, size = 0x4, scoped, tag = 'scoped memory for tpu_custom_call.1']
    #allocation9 [shape = 'u8[8192]{0}', space=vmem, size = 0x2000, scoped, tag = 'output window, operand 0, single buffered']
    %19 = vsyncpa [#allocation5], 0
    %20 = vsyncpa [#allocation8], 0
    %21 = vsyncpa [#allocation6], 0
    // Predicated region
    $region2: #{tpu_custom_call.1} parent=1 // pred_check
      _
    $region3: #{tpu_custom_call.1} parent=1 // pred_check_branch
      %23 = sbr.rel (0) target = $region5
    $region4: #{tpu_custom_call.1} parent=1 // pred_region
      %25 = vsyncadd [#allocation5], 0
      %s26 = sshll.u32 %s1, 4
      %s27 = int_to_ptr.hbm [resolvable:$true] %s26
      %s28 = sshll.u32 [#allocation4], 4
      %s29 = int_to_ptr.vmem [resolvable:$true] %s28
      %34 = dma.hbm_to_vmem [thread:$0]  %s27, 256, %s29, [#allocation5], 128, 128, 8
    $region5: #{tpu_custom_call.1} parent=1 // pred_fallthru
      _
    // Predicated region
    $region6: #{tpu_custom_call.1} parent=1 // pred_check
      _
    $region7: #{tpu_custom_call.1} parent=1 // pred_check_branch
      %36 = sbr.rel (0) target = $region9
    $region8: #{tpu_custom_call.1} parent=1 // pred_region
      %38 = vsyncadd [#allocation8], 0
      %s39 = sshll.u32 %s2, 4
      %s40 = int_to_ptr.hbm [resolvable:$true] %s39
      %s41 = sshll.u32 [#allocation7], 4
      %s42 = int_to_ptr.vmem [resolvable:$true] %s41
      %47 = dma.hbm_to_vmem [thread:$0]  %s40, 256, %s42, [#allocation8], 128, 128, 8
    $region9: #{tpu_custom_call.1} parent=1 // pred_fallthru
      _
    // Predicated region
    $region10: #{tpu_custom_call.1} parent=1 // pred_check
      _
    $region11: #{tpu_custom_call.1} parent=1 // pred_check_branch
      %49 = sbr.rel (0) target = $region13
    $region12: #{tpu_custom_call.1} parent=1 // pred_region
      _
    $region13: #{tpu_custom_call.1} parent=1 // pred_fallthru
      _
    // Predicated region
    $region14: #{tpu_custom_call.1} parent=1 // pred_check
      _
    $region15: #{tpu_custom_call.1} parent=1 // pred_check_branch
      %51 = sbr.rel (0) target = $region17
    $region16: #{tpu_custom_call.1} parent=1 // pred_region
      _
    $region17: #{tpu_custom_call.1} parent=1 // pred_fallthru
      _
    // Predicated region
    $region18: #{tpu_custom_call.1} parent=1 // pred_check
      _
    $region19: #{tpu_custom_call.1} parent=1 // pred_check_branch
      %53 = sbr.rel (0) target = $region21
    $region20: #{tpu_custom_call.1} parent=1 // pred_region
      _
    $region21: #{tpu_custom_call.1} parent=1 // pred_fallthru
      _
    // Predicated region
    $region22: #{tpu_custom_call.1} parent=1 // pred_check
      _
    $region23: #{tpu_custom_call.1} parent=1 // pred_check_branch
      %55 = sbr.rel (0) target = $region25
    $region24: #{tpu_custom_call.1} parent=1 // pred_region
      %57 = dma.done [#allocation5], 256
    $region25: #{tpu_custom_call.1} parent=1 // pred_fallthru
      _
    // Predicated region
    $region26: #{tpu_custom_call.1} parent=1 // pred_check
      _
    $region27: #{tpu_custom_call.1} parent=1 // pred_check_branch
      %59 = sbr.rel (0) target = $region29
    $region28: #{tpu_custom_call.1} parent=1 // pred_region
      %61 = dma.done [#allocation8], 256
    $region29: #{tpu_custom_call.1} parent=1 // pred_fallthru
      _
    %v62 = vld [vmem:[#allocation4] sm:$0xff]
    %v63 = vld [vmem:[#allocation4 + $0x8] sm:$0xff]
    %v64 = vld [vmem:[#allocation7] sm:$0xff]
    %v65 = vld [vmem:[#allocation7 + $0x8] sm:$0xff]
    %v66 = vld [vmem:[%s3] sm:$0xff]
    %v67 = vld [vmem:[%s3 + $0x8] sm:$0xff]
    %v68 = vld [vmem:[%s3 + $0x10] sm:$0xff]
    %v69 = vld [vmem:[%s3 + $0x18] sm:$0xff]
    %v70 = vld [vmem:[%s3 + $0x20] sm:$0xff]
    %v71 = vld [vmem:[%s3 + $0x28] sm:$0xff]
    %v72 = vld [vmem:[%s3 + $0x30] sm:$0xff]
    %v73 = vld [vmem:[%s3 + $0x38] sm:$0xff]
    %v74 = vld [vmem:[%s4] sm:$0xff]
    %v75 = vld [vmem:[%s4 + $0x8] sm:$0xff]
    %v76 = vld [vmem:[%s4 + $0x10] sm:$0xff]
    %v77 = vld [vmem:[%s4 + $0x18] sm:$0xff]
    %v78 = vld [vmem:[%s4 + $0x20] sm:$0x1]
    %v79 = vld [vmem:[%s5] sm:$0xff]
    %v80 = vld [vmem:[%s5 + $0x8] sm:$0xff]
    %v81 = vld [vmem:[%s5 + $0x10] sm:$0xff]
    %v82 = vld [vmem:[%s5 + $0x18] sm:$0xff]
    %v83 = vld [vmem:[%s5 + $0x20] sm:$0xff]
    %v84 = vld [vmem:[%s5 + $0x28] sm:$0xff]
    %v85 = vld [vmem:[%s5 + $0x30] sm:$0xff]
    %v86 = vld [vmem:[%s5 + $0x38] sm:$0xff]
    %v87 = vld [vmem:[%s5 + $0x40] sm:$0x1]
    %vm88 = vcmask 261120
    %v90 = vsel %vm88, %v62, 0
    %v93 = vsel %vm88, %v63, 0
    %95 = vmatpush.msra.mxu0 0.0
    %96 = vmatpush.msra.mxu0 0.0
    %97 = vmatpush.msra.mxu0 0.0
    %98 = vmatpush.msra.mxu0 0.0
    %99 = vmatpush.msra.mxu0 0.0
    %100 = vmatpush.msra.mxu0 0.0
    %101 = vmatpush.msra.mxu0 0.0
    %102 = vmatpush.msra.mxu0 0.0
    %103 = vmatpush.msra.mxu0 0.0
    %104 = vmatpush.msra.mxu0 0.0
    %105 = vmatpush.msra.mxu0 0.0
    %106 = vmatpush.msra.mxu0 0.0
    %107 = vmatpush.msra.mxu0 %v72
    %108 = vmatpush.msra.mxu0 %v70
    %109 = vmatpush.msra.mxu0 %v68
    %110 = vmatpush.msra.mxu0 %v66
    %111 = vmatmul.f32.gmra.mxu0 %v90
    %v112 = vpop.f32.mrf.mxu0
    %v113 = vadd.f32 0.0, %v112
    %114 = vmatmul.f32.gmra.mxu0 %v93
    %v115 = vpop.f32.mrf.mxu0
    %v116 = vadd.f32 0.0, %v115
    %117 = vdwg.mxu0
    %v118 = vlaneseq
    %v119 = vshrl.u32 %v118, 7
    %v120 = vlaneseq
    %v121 = vand.u32 %v120, 127
    %vm122 = vcmp.le.s32.totalorder %v121, %v119
    %125 = vrot.lane.b32.xlu0 %v113, 120
    %v126 = vpop.permute.xlu0 %125
    %127 = vrot.lane.b32.xlu0 %v116, 120
    %v128 = vpop.permute.xlu0 %127
    %129 = vrot.lane.b32.xlu0 %v113, 112
    %v130 = vpop.permute.xlu0 %129
    %131 = vrot.lane.b32.xlu0 %v116, 112
    %v132 = vpop.permute.xlu0 %131
    %133 = vrot.lane.b32.xlu0 %v113, 104
    %v134 = vpop.permute.xlu0 %133
    %135 = vrot.lane.b32.xlu0 %v116, 104
    %v136 = vpop.permute.xlu0 %135
    %137 = vrot.lane.b32.xlu0 %v113, 96
    %v138 = vpop.permute.xlu0 %137
    %vm139 = vcmask 64512
    %v140 = vsel %vm139, %v113, 0
    %v142 = vsel %vm139, %v138, 0
    %144 = vmatpush.xpose.msra.mxu0 0.0
    %145 = vmatpush.xpose.msra.mxu0 0.0
    %146 = vmatpush.xpose.msra.mxu0 0.0
    %147 = vmatpush.xpose.msra.mxu0 0.0
    %148 = vmatpush.xpose.msra.mxu0 0.0
    %149 = vmatpush.xpose.msra.mxu0 0.0
    %150 = vmatpush.xpose.msra.mxu0 0.0
    %151 = vmatpush.xpose.msra.mxu0 0.0
    %152 = vmatpush.xpose.msra.mxu0 0.0
    %153 = vmatpush.xpose.msra.mxu0 0.0
    %154 = vmatpush.xpose.msra.mxu0 0.0
    %155 = vmatpush.xpose.msra.mxu0 0.0
    %156 = vmatpush.xpose.msra.mxu0 0.0
    %157 = vmatpush.xpose.msra.mxu0 0.0
    %158 = vmatpush.xpose.msra.mxu0 0.0
    %159 = vmatpush.xpose.msra.mxu0 %v142
    %160 = vmatmul.f32.gmra.mxu0 %v140
    %v161 = vpop.f32.mrf.mxu0
    %v162 = vadd.f32 0.0, %v161
    %163 = vdwg.mxu0
    %164 = vrot.lane.b32.xlu0 %v116, 96
    %v165 = vpop.permute.xlu0 %164
    %v166 = vsel %vm139, %v116, 0
    %v168 = vsel %vm139, %v165, 0
    %170 = vmatpush.xpose.msra.mxu0 0.0
    %171 = vmatpush.xpose.msra.mxu0 0.0
    %172 = vmatpush.xpose.msra.mxu0 0.0
    %173 = vmatpush.xpose.msra.mxu0 0.0
    %174 = vmatpush.xpose.msra.mxu0 0.0
    %175 = vmatpush.xpose.msra.mxu0 0.0
    %176 = vmatpush.xpose.msra.mxu0 0.0
    %177 = vmatpush.xpose.msra.mxu0 0.0
    %178 = vmatpush.xpose.msra.mxu0 0.0
    %179 = vmatpush.xpose.msra.mxu0 0.0
    %180 = vmatpush.xpose.msra.mxu0 0.0
    %181 = vmatpush.xpose.msra.mxu0 0.0
    %182 = vmatpush.xpose.msra.mxu0 0.0
    %183 = vmatpush.xpose.msra.mxu0 0.0
    %184 = vmatpush.xpose.msra.mxu0 0.0
    %185 = vmatpush.xpose.msra.mxu0 %v168
    %186 = vmatmul.f32.gmra.mxu0 %v166
    %v187 = vpop.f32.mrf.mxu0
    %v188 = vadd.f32 0.0, %v187
    %189 = vdwg.mxu0
    %190 = vrot.lane.b32.xlu0 %v126, 96
    %v191 = vpop.permute.xlu0 %190
    %v192 = vsel %vm139, %v126, 0
    %v194 = vsel %vm139, %v191, 0
    %196 = vmatpush.xpose.msra.mxu0 0.0
    %197 = vmatpush.xpose.msra.mxu0 0.0
    %198 = vmatpush.xpose.msra.mxu0 0.0
    %199 = vmatpush.xpose.msra.mxu0 0.0
    %200 = vmatpush.xpose.msra.mxu0 0.0
    %201 = vmatpush.xpose.msra.mxu0 0.0
    %202 = vmatpush.xpose.msra.mxu0 0.0
    %203 = vmatpush.xpose.msra.mxu0 0.0
    %204 = vmatpush.xpose.msra.mxu0 0.0
    %205 = vmatpush.xpose.msra.mxu0 0.0
    %206 = vmatpush.xpose.msra.mxu0 0.0
    %207 = vmatpush.xpose.msra.mxu0 0.0
    %208 = vmatpush.xpose.msra.mxu0 0.0
    %209 = vmatpush.xpose.msra.mxu0 0.0
    %210 = vmatpush.xpose.msra.mxu0 0.0
    %211 = vmatpush.xpose.msra.mxu0 %v194
    %212 = vmatmul.f32.gmra.mxu0 %v192
    %v213 = vpop.f32.mrf.mxu0
    %v214 = vadd.f32 0.0, %v213
    %215 = vdwg.mxu0
    %216 = vrot.lane.b32.xlu0 %v128, 96
    %v217 = vpop.permute.xlu0 %216
    %v218 = vsel %vm139, %v128, 0
    %v220 = vsel %vm139, %v217, 0
    %222 = vmatpush.xpose.msra.mxu0 0.0
    %223 = vmatpush.xpose.msra.mxu0 0.0
    %224 = vmatpush.xpose.msra.mxu0 0.0
    %225 = vmatpush.xpose.msra.mxu0 0.0
    %226 = vmatpush.xpose.msra.mxu0 0.0
    %227 = vmatpush.xpose.msra.mxu0 0.0
    %228 = vmatpush.xpose.msra.mxu0 0.0
    %229 = vmatpush.xpose.msra.mxu0 0.0
    %230 = vmatpush.xpose.msra.mxu0 0.0
    %231 = vmatpush.xpose.msra.mxu0 0.0
    %232 = vmatpush.xpose.msra.mxu0 0.0
    %233 = vmatpush.xpose.msra.mxu0 0.0
    %234 = vmatpush.xpose.msra.mxu0 0.0
    %235 = vmatpush.xpose.msra.mxu0 0.0
    %236 = vmatpush.xpose.msra.mxu0 0.0
    %237 = vmatpush.xpose.msra.mxu0 %v220
    %238 = vmatmul.f32.gmra.mxu0 %v218
    %v239 = vpop.f32.mrf.mxu0
    %v240 = vadd.f32 0.0, %v239
    %241 = vdwg.mxu0
    %242 = vrot.lane.b32.xlu0 %v130, 96
    %v243 = vpop.permute.xlu0 %242
    %v244 = vsel %vm139, %v130, 0
    %v246 = vsel %vm139, %v243, 0
    %248 = vmatpush.xpose.msra.mxu0 0.0
    %249 = vmatpush.xpose.msra.mxu0 0.0
    %250 = vmatpush.xpose.msra.mxu0 0.0
    %251 = vmatpush.xpose.msra.mxu0 0.0
    %252 = vmatpush.xpose.msra.mxu0 0.0
    %253 = vmatpush.xpose.msra.mxu0 0.0
    %254 = vmatpush.xpose.msra.mxu0 0.0
    %255 = vmatpush.xpose.msra.mxu0 0.0
    %256 = vmatpush.xpose.msra.mxu0 0.0
    %257 = vmatpush.xpose.msra.mxu0 0.0
    %258 = vmatpush.xpose.msra.mxu0 0.0
    %259 = vmatpush.xpose.msra.mxu0 0.0
    %260 = vmatpush.xpose.msra.mxu0 0.0
    %261 = vmatpush.xpose.msra.mxu0 0.0
    %262 = vmatpush.xpose.msra.mxu0 0.0
    %263 = vmatpush.xpose.msra.mxu0 %v246
    %264 = vmatmul.f32.gmra.mxu0 %v244
    %v265 = vpop.f32.mrf.mxu0
    %v266 = vadd.f32 0.0, %v265
    %267 = vdwg.mxu0
    %268 = vrot.lane.b32.xlu0 %v132, 96
    %v269 = vpop.permute.xlu0 %268
    %v270 = vsel %vm139, %v132, 0
    %v272 = vsel %vm139, %v269, 0
    %274 = vmatpush.xpose.msra.mxu0 0.0
    %275 = vmatpush.xpose.msra.mxu0 0.0
    %276 = vmatpush.xpose.msra.mxu0 0.0
    %277 = vmatpush.xpose.msra.mxu0 0.0
    %278 = vmatpush.xpose.msra.mxu0 0.0
    %279 = vmatpush.xpose.msra.mxu0 0.0
    %280 = vmatpush.xpose.msra.mxu0 0.0
    %281 = vmatpush.xpose.msra.mxu0 0.0
    %282 = vmatpush.xpose.msra.mxu0 0.0
    %283 = vmatpush.xpose.msra.mxu0 0.0
    %284 = vmatpush.xpose.msra.mxu0 0.0
    %285 = vmatpush.xpose.msra.mxu0 0.0
    %286 = vmatpush.xpose.msra.mxu0 0.0
    %287 = vmatpush.xpose.msra.mxu0 0.0
    %288 = vmatpush.xpose.msra.mxu0 0.0
    %289 = vmatpush.xpose.msra.mxu0 %v272
    %290 = vmatmul.f32.gmra.mxu0 %v270
    %v291 = vpop.f32.mrf.mxu0
    %v292 = vadd.f32 0.0, %v291
    %293 = vdwg.mxu0
    %294 = vrot.lane.b32.xlu0 %v134, 96
    %v295 = vpop.permute.xlu0 %294
    %v296 = vsel %vm139, %v134, 0
    %v298 = vsel %vm139, %v295, 0
    %300 = vmatpush.xpose.msra.mxu0 0.0
    %301 = vmatpush.xpose.msra.mxu0 0.0
    %302 = vmatpush.xpose.msra.mxu0 0.0
    %303 = vmatpush.xpose.msra.mxu0 0.0
    %304 = vmatpush.xpose.msra.mxu0 0.0
    %305 = vmatpush.xpose.msra.mxu0 0.0
    %306 = vmatpush.xpose.msra.mxu0 0.0
    %307 = vmatpush.xpose.msra.mxu0 0.0
    %308 = vmatpush.xpose.msra.mxu0 0.0
    %309 = vmatpush.xpose.msra.mxu0 0.0
    %310 = vmatpush.xpose.msra.mxu0 0.0
    %311 = vmatpush.xpose.msra.mxu0 0.0
    %312 = vmatpush.xpose.msra.mxu0 0.0
    %313 = vmatpush.xpose.msra.mxu0 0.0
    %314 = vmatpush.xpose.msra.mxu0 0.0
    %315 = vmatpush.xpose.msra.mxu0 %v298
    %316 = vmatmul.f32.gmra.mxu0 %v296
    %v317 = vpop.f32.mrf.mxu0
    %v318 = vadd.f32 0.0, %v317
    %319 = vdwg.mxu0
    %320 = vrot.lane.b32.xlu0 %v136, 96
    %v321 = vpop.permute.xlu0 %320
    %v322 = vsel %vm139, %v136, 0
    %v324 = vsel %vm139, %v321, 0
    %326 = vmatpush.xpose.msra.mxu0 0.0
    %327 = vmatpush.xpose.msra.mxu0 0.0
    %328 = vmatpush.xpose.msra.mxu0 0.0
    %329 = vmatpush.xpose.msra.mxu0 0.0
    %330 = vmatpush.xpose.msra.mxu0 0.0
    %331 = vmatpush.xpose.msra.mxu0 0.0
    %332 = vmatpush.xpose.msra.mxu0 0.0
    %333 = vmatpush.xpose.msra.mxu0 0.0
    %334 = vmatpush.xpose.msra.mxu0 0.0
    %335 = vmatpush.xpose.msra.mxu0 0.0
    %336 = vmatpush.xpose.msra.mxu0 0.0
    %337 = vmatpush.xpose.msra.mxu0 0.0
    %338 = vmatpush.xpose.msra.mxu0 0.0
    %339 = vmatpush.xpose.msra.mxu0 0.0
    %340 = vmatpush.xpose.msra.mxu0 0.0
    %341 = vmatpush.xpose.msra.mxu0 %v324
    %342 = vmatmul.f32.gmra.mxu0 %v322
    %v343 = vpop.f32.mrf.mxu0
    %v344 = vadd.f32 0.0, %v343
    %345 = vdwg.mxu0
    %v346 = vsel %vm122, 1, 0
    %vm347 = vcmp.eq.s32.totalorder %v346, 1
    %v348 = vsel %vm347, %v162, -1000000.0
    %v349 = vsel %vm347, %v188, -1000000.0
    %v350 = vsel %vm347, %v214, -1000000.0
    %v351 = vsel %vm347, %v240, -1000000.0
    %v352 = vsel %vm347, %v266, -1000000.0
    %v353 = vsel %vm347, %v292, -1000000.0
    %v354 = vsel %vm347, %v318, -1000000.0
    %v355 = vsel %vm347, %v344, -1000000.0
    %v356 = vsel %vm139, %v348, -inf
    %357 = vmax.xlane.f32.xlu0 %v356
    %v358 = vpop.xlane.xlu0 %357
    %v359 = vsel %vm139, %v349, -inf
    %360 = vmax.xlane.f32.xlu0 %v359
    %v361 = vpop.xlane.xlu0 %360
    %v362 = vsel %vm139, %v350, -inf
    %363 = vmax.xlane.f32.xlu0 %v362
    %v364 = vpop.xlane.xlu0 %363
    %v365 = vsel %vm139, %v351, -inf
    %366 = vmax.xlane.f32.xlu0 %v365
    %v367 = vpop.xlane.xlu0 %366
    %v368 = vsel %vm139, %v352, -inf
    %369 = vmax.xlane.f32.xlu0 %v368
    %v370 = vpop.xlane.xlu0 %369
    %v371 = vsel %vm139, %v353, -inf
    %372 = vmax.xlane.f32.xlu0 %v371
    %v373 = vpop.xlane.xlu0 %372
    %v374 = vsel %vm139, %v354, -inf
    %375 = vmax.xlane.f32.xlu0 %v374
    %v376 = vpop.xlane.xlu0 %375
    %v377 = vsel %vm139, %v355, -inf
    %378 = vmax.xlane.f32.xlu0 %v377
    %v379 = vpop.xlane.xlu0 %378
    %v380 = vsub.f32 %v348, %v358
    %v381 = vsub.f32 %v349, %v361
    %v382 = vsub.f32 %v350, %v364
    %v383 = vsub.f32 %v351, %v367
    %v384 = vsub.f32 %v352, %v370
    %v385 = vsub.f32 %v353, %v373
    %v386 = vsub.f32 %v354, %v376
    %v387 = vsub.f32 %v355, %v379
    %v388 = vmul.f32 %v380, 1.442695
    %v389 = vpow.pop %v388
    %v390 = vmul.f32 %v381, 1.442695
    %v391 = vpow.pop %v390
    %v392 = vmul.f32 %v382, 1.442695
    %v393 = vpow.pop %v392
    %v394 = vmul.f32 %v383, 1.442695
    %v395 = vpow.pop %v394
    %v396 = vmul.f32 %v384, 1.442695
    %v397 = vpow.pop %v396
    %v398 = vmul.f32 %v385, 1.442695
    %v399 = vpow.pop %v398
    %v400 = vmul.f32 %v386, 1.442695
    %v401 = vpow.pop %v400
    %v402 = vmul.f32 %v387, 1.442695
    %v403 = vpow.pop %v402
    %v404 = vsel %vm139, %v389, 0.0
    %405 = vadd.xlane.f32.xlu0 %v404
    %v406 = vpop.xlane.xlu0 %405
    %v407 = vsel %vm139, %v391, 0.0
    %408 = vadd.xlane.f32.xlu0 %v407
    %v409 = vpop.xlane.xlu0 %408
    %v410 = vsel %vm139, %v393, 0.0
    %411 = vadd.xlane.f32.xlu0 %v410
    %v412 = vpop.xlane.xlu0 %411
    %v413 = vsel %vm139, %v395, 0.0
    %414 = vadd.xlane.f32.xlu0 %v413
    %v415 = vpop.xlane.xlu0 %414
    %v416 = vsel %vm139, %v397, 0.0
    %417 = vadd.xlane.f32.xlu0 %v416
    %v418 = vpop.xlane.xlu0 %417
    %v419 = vsel %vm139, %v399, 0.0
    %420 = vadd.xlane.f32.xlu0 %v419
    %v421 = vpop.xlane.xlu0 %420
    %v422 = vsel %vm139, %v401, 0.0
    %423 = vadd.xlane.f32.xlu0 %v422
    %v424 = vpop.xlane.xlu0 %423
    %v425 = vsel %vm139, %v403, 0.0
    %426 = vadd.xlane.f32.xlu0 %v425
    %v427 = vpop.xlane.xlu0 %426
    %v428 = vrcp.pop %v406
    %v429 = vmul.f32 %v406, %v428
    %v430 = vsub.f32 1.0, %v429
    %v431 = vmul.f32 %v428, %v430
    %v432 = vadd.f32 %v428, %v431
    %vm433 = vweird.f32 %v406
    %vm434 = vweird.f32 %v428
    %vm435 = vmor %vm433, %vm434
    %v436 = vsel %vm435, %v428, %v432
    %v437 = vand.u32 2147483647, %v406
    %vm438 = vcmp.eq.f32.partialorder %v437, 8.507059e+37
    %v439 = vand.u32 %v406, 2147483648
    %v440 = vor.u32 1.1754944e-38, %v439
    %v441 = vsel %vm438, %v440, %v436
    %v442 = vmul.f32 %v389, %v441
    %v443 = vrcp.pop %v409
    %v444 = vmul.f32 %v409, %v443
    %v445 = vsub.f32 1.0, %v444
    %v446 = vmul.f32 %v443, %v445
    %v447 = vadd.f32 %v443, %v446
    %vm448 = vweird.f32 %v409
    %vm449 = vweird.f32 %v443
    %vm450 = vmor %vm448, %vm449
    %v451 = vsel %vm450, %v443, %v447
    %v452 = vand.u32 2147483647, %v409
    %vm453 = vcmp.eq.f32.partialorder %v452, 8.507059e+37
    %v454 = vand.u32 %v409, 2147483648
    %v455 = vor.u32 1.1754944e-38, %v454
    %v456 = vsel %vm453, %v455, %v451
    %v457 = vmul.f32 %v391, %v456
    %v458 = vrcp.pop %v412
    %v459 = vmul.f32 %v412, %v458
    %v460 = vsub.f32 1.0, %v459
    %v461 = vmul.f32 %v458, %v460
    %v462 = vadd.f32 %v458, %v461
    %vm463 = vweird.f32 %v412
    %vm464 = vweird.f32 %v458
    %vm465 = vmor %vm463, %vm464
    %v466 = vsel %vm465, %v458, %v462
    %v467 = vand.u32 2147483647, %v412
    %vm468 = vcmp.eq.f32.partialorder %v467, 8.507059e+37
    %v469 = vand.u32 %v412, 2147483648
    %v470 = vor.u32 1.1754944e-38, %v469
    %v471 = vsel %vm468, %v470, %v466
    %v472 = vmul.f32 %v393, %v471
    %v473 = vrcp.pop %v415
    %v474 = vmul.f32 %v415, %v473
    %v475 = vsub.f32 1.0, %v474
    %v476 = vmul.f32 %v473, %v475
    %v477 = vadd.f32 %v473, %v476
    %vm478 = vweird.f32 %v415
    %vm479 = vweird.f32 %v473
    %vm480 = vmor %vm478, %vm479
    %v481 = vsel %vm480, %v473, %v477
    %v482 = vand.u32 2147483647, %v415
    %vm483 = vcmp.eq.f32.partialorder %v482, 8.507059e+37
    %v484 = vand.u32 %v415, 2147483648
    %v485 = vor.u32 1.1754944e-38, %v484
    %v486 = vsel %vm483, %v485, %v481
    %v487 = vmul.f32 %v395, %v486
    %v488 = vrcp.pop %v418
    %v489 = vmul.f32 %v418, %v488
    %v490 = vsub.f32 1.0, %v489
    %v491 = vmul.f32 %v488, %v490
    %v492 = vadd.f32 %v488, %v491
    %vm493 = vweird.f32 %v418
    %vm494 = vweird.f32 %v488
    %vm495 = vmor %vm493, %vm494
    %v496 = vsel %vm495, %v488, %v492
    %v497 = vand.u32 2147483647, %v418
    %vm498 = vcmp.eq.f32.partialorder %v497, 8.507059e+37
    %v499 = vand.u32 %v418, 2147483648
    %v500 = vor.u32 1.1754944e-38, %v499
    %v501 = vsel %vm498, %v500, %v496
    %v502 = vmul.f32 %v397, %v501
    %v503 = vrcp.pop %v421
    %v504 = vmul.f32 %v421, %v503
    %v505 = vsub.f32 1.0, %v504
    %v506 = vmul.f32 %v503, %v505
    %v507 = vadd.f32 %v503, %v506
    %vm508 = vweird.f32 %v421
    %vm509 = vweird.f32 %v503
    %vm510 = vmor %vm508, %vm509
    %v511 = vsel %vm510, %v503, %v507
    %v512 = vand.u32 2147483647, %v421
    %vm513 = vcmp.eq.f32.partialorder %v512, 8.507059e+37
    %v514 = vand.u32 %v421, 2147483648
    %v515 = vor.u32 1.1754944e-38, %v514
    %v516 = vsel %vm513, %v515, %v511
    %v517 = vmul.f32 %v399, %v516
    %v518 = vrcp.pop %v424
    %v519 = vmul.f32 %v424, %v518
    %v520 = vsub.f32 1.0, %v519
    %v521 = vmul.f32 %v518, %v520
    %v522 = vadd.f32 %v518, %v521
    %vm523 = vweird.f32 %v424
    %vm524 = vweird.f32 %v518
    %vm525 = vmor %vm523, %vm524
    %v526 = vsel %vm525, %v518, %v522
    %v527 = vand.u32 2147483647, %v424
    %vm528 = vcmp.eq.f32.partialorder %v527, 8.507059e+37
    %v529 = vand.u32 %v424, 2147483648
    %v530 = vor.u32 1.1754944e-38, %v529
    %v531 = vsel %vm528, %v530, %v526
    %v532 = vmul.f32 %v401, %v531
    %v533 = vrcp.pop %v427
    %v534 = vmul.f32 %v427, %v533
    %v535 = vsub.f32 1.0, %v534
    %v536 = vmul.f32 %v533, %v535
    %v537 = vadd.f32 %v533, %v536
    %vm538 = vweird.f32 %v427
    %vm539 = vweird.f32 %v533
    %vm540 = vmor %vm538, %vm539
    %v541 = vsel %vm540, %v533, %v537
    %v542 = vand.u32 2147483647, %v427
    %vm543 = vcmp.eq.f32.partialorder %v542, 8.507059e+37
    %v544 = vand.u32 %v427, 2147483648
    %v545 = vor.u32 1.1754944e-38, %v544
    %v546 = vsel %vm543, %v545, %v541
    %v547 = vmul.f32 %v403, %v546
    %548 = vrot.lane.b32.xlu0 %v113, 64
    %v549 = vpop.permute.xlu0 %548
    %v552 = vsel %vm139, %v442, 0
    %554 = vmatpush.msra.mxu0 0.0
    %555 = vmatpush.msra.mxu0 0.0
    %556 = vmatpush.msra.mxu0 0.0
    %557 = vmatpush.msra.mxu0 0.0
    %558 = vmatpush.msra.mxu0 0.0
    %559 = vmatpush.msra.mxu0 0.0
    %560 = vmatpush.msra.mxu0 0.0
    %561 = vmatpush.msra.mxu0 0.0
    %562 = vmatpush.msra.mxu0 0.0
    %563 = vmatpush.msra.mxu0 0.0
    %564 = vmatpush.msra.mxu0 0.0
    %565 = vmatpush.msra.mxu0 0.0
    %566 = vmatpush.msra.mxu0 0.0
    %567 = vmatpush.msra.mxu0 0.0
    %568 = vmatpush.msra.mxu0 0.0
    %569 = vmatpush.msra.mxu0 %v549
    %570 = vmatmul.f32.gmra.mxu0 %v552
    %v571 = vpop.f32.mrf.mxu0
    %v572 = vadd.f32 0.0, %v571
    %573 = vdwg.mxu0
    %574 = vrot.lane.b32.xlu0 %v116, 64
    %v575 = vpop.permute.xlu0 %574
    %v578 = vsel %vm139, %v457, 0
    %580 = vmatpush.msra.mxu0 0.0
    %581 = vmatpush.msra.mxu0 0.0
    %582 = vmatpush.msra.mxu0 0.0
    %583 = vmatpush.msra.mxu0 0.0
    %584 = vmatpush.msra.mxu0 0.0
    %585 = vmatpush.msra.mxu0 0.0
    %586 = vmatpush.msra.mxu0 0.0
    %587 = vmatpush.msra.mxu0 0.0
    %588 = vmatpush.msra.mxu0 0.0
    %589 = vmatpush.msra.mxu0 0.0
    %590 = vmatpush.msra.mxu0 0.0
    %591 = vmatpush.msra.mxu0 0.0
    %592 = vmatpush.msra.mxu0 0.0
    %593 = vmatpush.msra.mxu0 0.0
    %594 = vmatpush.msra.mxu0 0.0
    %595 = vmatpush.msra.mxu0 %v575
    %596 = vmatmul.f32.gmra.mxu0 %v578
    %v597 = vpop.f32.mrf.mxu0
    %v598 = vadd.f32 0.0, %v597
    %599 = vdwg.mxu0
    %600 = vrot.lane.b32.xlu0 %v126, 64
    %v601 = vpop.permute.xlu0 %600
    %v604 = vsel %vm139, %v472, 0
    %606 = vmatpush.msra.mxu0 0.0
    %607 = vmatpush.msra.mxu0 0.0
    %608 = vmatpush.msra.mxu0 0.0
    %609 = vmatpush.msra.mxu0 0.0
    %610 = vmatpush.msra.mxu0 0.0
    %611 = vmatpush.msra.mxu0 0.0
    %612 = vmatpush.msra.mxu0 0.0
    %613 = vmatpush.msra.mxu0 0.0
    %614 = vmatpush.msra.mxu0 0.0
    %615 = vmatpush.msra.mxu0 0.0
    %616 = vmatpush.msra.mxu0 0.0
    %617 = vmatpush.msra.mxu0 0.0
    %618 = vmatpush.msra.mxu0 0.0
    %619 = vmatpush.msra.mxu0 0.0
    %620 = vmatpush.msra.mxu0 0.0
    %621 = vmatpush.msra.mxu0 %v601
    %622 = vmatmul.f32.gmra.mxu0 %v604
    %v623 = vpop.f32.mrf.mxu0
    %v624 = vadd.f32 0.0, %v623
    %625 = vdwg.mxu0
    %626 = vrot.lane.b32.xlu0 %v128, 64
    %v627 = vpop.permute.xlu0 %626
    %v630 = vsel %vm139, %v487, 0
    %632 = vmatpush.msra.mxu0 0.0
    %633 = vmatpush.msra.mxu0 0.0
    %634 = vmatpush.msra.mxu0 0.0
    %635 = vmatpush.msra.mxu0 0.0
    %636 = vmatpush.msra.mxu0 0.0
    %637 = vmatpush.msra.mxu0 0.0
    %638 = vmatpush.msra.mxu0 0.0
    %639 = vmatpush.msra.mxu0 0.0
    %640 = vmatpush.msra.mxu0 0.0
    %641 = vmatpush.msra.mxu0 0.0
    %642 = vmatpush.msra.mxu0 0.0
    %643 = vmatpush.msra.mxu0 0.0
    %644 = vmatpush.msra.mxu0 0.0
    %645 = vmatpush.msra.mxu0 0.0
    %646 = vmatpush.msra.mxu0 0.0
    %647 = vmatpush.msra.mxu0 %v627
    %648 = vmatmul.f32.gmra.mxu0 %v630
    %v649 = vpop.f32.mrf.mxu0
    %v650 = vadd.f32 0.0, %v649
    %651 = vdwg.mxu0
    %652 = vrot.lane.b32.xlu0 %v130, 64
    %v653 = vpop.permute.xlu0 %652
    %v656 = vsel %vm139, %v502, 0
    %658 = vmatpush.msra.mxu0 0.0
    %659 = vmatpush.msra.mxu0 0.0
    %660 = vmatpush.msra.mxu0 0.0
    %661 = vmatpush.msra.mxu0 0.0
    %662 = vmatpush.msra.mxu0 0.0
    %663 = vmatpush.msra.mxu0 0.0
    %664 = vmatpush.msra.mxu0 0.0
    %665 = vmatpush.msra.mxu0 0.0
    %666 = vmatpush.msra.mxu0 0.0
    %667 = vmatpush.msra.mxu0 0.0
    %668 = vmatpush.msra.mxu0 0.0
    %669 = vmatpush.msra.mxu0 0.0
    %670 = vmatpush.msra.mxu0 0.0
    %671 = vmatpush.msra.mxu0 0.0
    %672 = vmatpush.msra.mxu0 0.0
    %673 = vmatpush.msra.mxu0 %v653
    %674 = vmatmul.f32.gmra.mxu0 %v656
    %v675 = vpop.f32.mrf.mxu0
    %v676 = vadd.f32 0.0, %v675
    %677 = vdwg.mxu0
    %678 = vrot.lane.b32.xlu0 %v132, 64
    %v679 = vpop.permute.xlu0 %678
    %v682 = vsel %vm139, %v517, 0
    %684 = vmatpush.msra.mxu0 0.0
    %685 = vmatpush.msra.mxu0 0.0
    %686 = vmatpush.msra.mxu0 0.0
    %687 = vmatpush.msra.mxu0 0.0
    %688 = vmatpush.msra.mxu0 0.0
    %689 = vmatpush.msra.mxu0 0.0
    %690 = vmatpush.msra.mxu0 0.0
    %691 = vmatpush.msra.mxu0 0.0
    %692 = vmatpush.msra.mxu0 0.0
    %693 = vmatpush.msra.mxu0 0.0
    %694 = vmatpush.msra.mxu0 0.0
    %695 = vmatpush.msra.mxu0 0.0
    %696 = vmatpush.msra.mxu0 0.0
    %697 = vmatpush.msra.mxu0 0.0
    %698 = vmatpush.msra.mxu0 0.0
    %699 = vmatpush.msra.mxu0 %v679
    %700 = vmatmul.f32.gmra.mxu0 %v682
    %v701 = vpop.f32.mrf.mxu0
    %v702 = vadd.f32 0.0, %v701
    %703 = vdwg.mxu0
    %704 = vrot.lane.b32.xlu0 %v134, 64
    %v705 = vpop.permute.xlu0 %704
    %v708 = vsel %vm139, %v532, 0
    %710 = vmatpush.msra.mxu0 0.0
    %711 = vmatpush.msra.mxu0 0.0
    %712 = vmatpush.msra.mxu0 0.0
    %713 = vmatpush.msra.mxu0 0.0
    %714 = vmatpush.msra.mxu0 0.0
    %715 = vmatpush.msra.mxu0 0.0
    %716 = vmatpush.msra.mxu0 0.0
    %717 = vmatpush.msra.mxu0 0.0
    %718 = vmatpush.msra.mxu0 0.0
    %719 = vmatpush.msra.mxu0 0.0
    %720 = vmatpush.msra.mxu0 0.0
    %721 = vmatpush.msra.mxu0 0.0
    %722 = vmatpush.msra.mxu0 0.0
    %723 = vmatpush.msra.mxu0 0.0
    %724 = vmatpush.msra.mxu0 0.0
    %725 = vmatpush.msra.mxu0 %v705
    %726 = vmatmul.f32.gmra.mxu0 %v708
    %v727 = vpop.f32.mrf.mxu0
    %v728 = vadd.f32 0.0, %v727
    %729 = vdwg.mxu0
    %730 = vrot.lane.b32.xlu0 %v136, 64
    %v731 = vpop.permute.xlu0 %730
    %v734 = vsel %vm139, %v547, 0
    %736 = vmatpush.msra.mxu0 0.0
    %737 = vmatpush.msra.mxu0 0.0
    %738 = vmatpush.msra.mxu0 0.0
    %739 = vmatpush.msra.mxu0 0.0
    %740 = vmatpush.msra.mxu0 0.0
    %741 = vmatpush.msra.mxu0 0.0
    %742 = vmatpush.msra.mxu0 0.0
    %743 = vmatpush.msra.mxu0 0.0
    %744 = vmatpush.msra.mxu0 0.0
    %745 = vmatpush.msra.mxu0 0.0
    %746 = vmatpush.msra.mxu0 0.0
    %747 = vmatpush.msra.mxu0 0.0
    %748 = vmatpush.msra.mxu0 0.0
    %749 = vmatpush.msra.mxu0 0.0
    %750 = vmatpush.msra.mxu0 0.0
    %751 = vmatpush.msra.mxu0 %v731
    %752 = vmatmul.f32.gmra.mxu0 %v734
    %v753 = vpop.f32.mrf.mxu0
    %v754 = vadd.f32 0.0, %v753
    %755 = vdwg.mxu0
    %758 = vrot.lane.b32.xlu0 %v624, 8
    %v759 = vpop.permute.xlu0 %758
    %760 = vrot.lane.b32.xlu0 %v650, 8
    %v761 = vpop.permute.xlu0 %760
    %766 = vrot.lane.b32.xlu0 %v676, 16
    %v767 = vpop.permute.xlu0 %766
    %768 = vrot.lane.b32.xlu0 %v702, 16
    %v769 = vpop.permute.xlu0 %768
    %774 = vrot.lane.b32.xlu0 %v728, 24
    %v775 = vpop.permute.xlu0 %774
    %776 = vrot.lane.b32.xlu0 %v754, 24
    %v777 = vpop.permute.xlu0 %776
    %v780 = vsel %vm139, %v572, %v759
    %v781 = vsel %vm139, %v598, %v761
    %vm782 = vcmask 130048
    %v783 = vsel %vm782, %v780, %v767
    %v784 = vsel %vm782, %v781, %v769
    %vm785 = vcmask 195584
    %v786 = vsel %vm785, %v783, %v775
    %v787 = vsel %vm785, %v784, %v777
    %792 = vrot.lane.b32.xlu0 %v66, 32
    %v793 = vpop.permute.xlu0 %792
    %794 = vrot.lane.b32.xlu0 %v68, 32
    %v795 = vpop.permute.xlu0 %794
    %796 = vrot.lane.b32.xlu0 %v70, 32
    %v797 = vpop.permute.xlu0 %796
    %798 = vrot.lane.b32.xlu0 %v72, 32
    %v799 = vpop.permute.xlu0 %798
    %v805 = vsel %vm88, %v786, 0
    %v808 = vsel %vm88, %v787, 0
    %810 = vmatpush.msra.mxu0 0.0
    %811 = vmatpush.msra.mxu0 0.0
    %812 = vmatpush.msra.mxu0 0.0
    %813 = vmatpush.msra.mxu0 0.0
    %814 = vmatpush.msra.mxu0 0.0
    %815 = vmatpush.msra.mxu0 0.0
    %816 = vmatpush.msra.mxu0 0.0
    %817 = vmatpush.msra.mxu0 0.0
    %818 = vmatpush.msra.mxu0 0.0
    %819 = vmatpush.msra.mxu0 0.0
    %820 = vmatpush.msra.mxu0 0.0
    %821 = vmatpush.msra.mxu0 0.0
    %822 = vmatpush.msra.mxu0 %v799
    %823 = vmatpush.msra.mxu0 %v797
    %824 = vmatpush.msra.mxu0 %v795
    %825 = vmatpush.msra.mxu0 %v793
    %826 = vmatmul.f32.gmra.mxu0 %v805
    %v827 = vpop.f32.mrf.mxu0
    %v828 = vadd.f32 0.0, %v827
    %829 = vmatmul.f32.gmra.mxu0 %v808
    %v830 = vpop.f32.mrf.mxu0
    %v831 = vadd.f32 0.0, %v830
    %832 = vdwg.mxu0
    %v833 = vadd.f32 %v62, %v828
    %v834 = vadd.f32 %v63, %v831
    %v835 = vsel %vm88, %v833, 0.0
    %836 = vadd.xlane.f32.xlu0 %v835
    %v837 = vpop.xlane.xlu0 %836
    %v838 = vsel %vm88, %v834, 0.0
    %839 = vadd.xlane.f32.xlu0 %v838
    %v840 = vpop.xlane.xlu0 %839
    %v841 = vrcp.pop 32.0
    %v842 = vmul.f32 32.0, %v841
    %v843 = vsub.f32 1.0, %v842
    %v844 = vmul.f32 %v841, %v843
    %v845 = vadd.f32 %v841, %v844
    %vm846 = vweird.f32 %v841
    %v847 = vsel %vm846, %v841, %v845
    %v848 = vmul.f32 %v837, %v847
    %v849 = vmul.f32 %v840, %v847
    %v850 = vsub.f32 %v833, %v848
    %v851 = vsub.f32 %v834, %v849
    %v852 = vmul.f32 %v850, %v850
    %v853 = vmul.f32 %v851, %v851
    %v854 = vsel %vm88, %v852, 0.0
    %855 = vadd.xlane.f32.xlu0 %v854
    %v856 = vpop.xlane.xlu0 %855
    %v857 = vsel %vm88, %v853, 0.0
    %858 = vadd.xlane.f32.xlu0 %v857
    %v859 = vpop.xlane.xlu0 %858
    %v860 = vmul.f32 %v856, %v847
    %v861 = vmul.f32 %v859, %v847
    %v862 = vadd.f32 %v860, 1e-05
    %v863 = vadd.f32 %v861, 1e-05
    %v864 = vrsqrt.pop %v862
    %v865 = vmul.f32 %v864, %v862
    %v866 = vmul.f32 %v865, %v864
    %v867 = vmul.f32 0.5, %v866
    %v868 = vsub.f32 1.5, %v867
    %v869 = vmul.f32 %v864, %v868
    %vm870 = vweird.f32 %v862
    %vm871 = vweird.f32 %v864
    %vm872 = vmor %vm870, %vm871
    %v873 = vsel %vm872, %v864, %v869
    %v874 = vrsqrt.pop %v863
    %v875 = vmul.f32 %v874, %v863
    %v876 = vmul.f32 %v875, %v874
    %v877 = vmul.f32 0.5, %v876
    %v878 = vsub.f32 1.5, %v877
    %v879 = vmul.f32 %v874, %v878
    %vm880 = vweird.f32 %v863
    %vm881 = vweird.f32 %v874
    %vm882 = vmor %vm880, %vm881
    %v883 = vsel %vm882, %v874, %v879
    %v884 = vmul.f32 %v850, %v873
    %v885 = vmul.f32 %v851, %v883
    %v887 = vsel %vm88, %v884, 0
    %v890 = vsel %vm88, %v885, 0
    %892 = vmatpush.msra.mxu0 0.0
    %893 = vmatpush.msra.mxu0 0.0
    %894 = vmatpush.msra.mxu0 0.0
    %895 = vmatpush.msra.mxu0 0.0
    %896 = vmatpush.msra.mxu0 0.0
    %897 = vmatpush.msra.mxu0 0.0
    %898 = vmatpush.msra.mxu0 0.0
    %899 = vmatpush.msra.mxu0 0.0
    %900 = vmatpush.msra.mxu0 0.0
    %901 = vmatpush.msra.mxu0 0.0
    %902 = vmatpush.msra.mxu0 0.0
    %903 = vmatpush.msra.mxu0 0.0
    %904 = vmatpush.msra.mxu0 %v73
    %905 = vmatpush.msra.mxu0 %v71
    %906 = vmatpush.msra.mxu0 %v69
    %907 = vmatpush.msra.mxu0 %v67
    %908 = vmatmul.f32.gmra.mxu0 %v887
    %v909 = vpop.f32.mrf.mxu0
    %v910 = vadd.f32 0.0, %v909
    %911 = vmatmul.f32.gmra.mxu0 %v890
    %v912 = vpop.f32.mrf.mxu0
    %v913 = vadd.f32 0.0, %v912
    %914 = vdwg.mxu0
    %919 = vrot.lane.b32.xlu0 %v67, 96
    %v920 = vpop.permute.xlu0 %919
    %921 = vrot.lane.b32.xlu0 %v69, 96
    %v922 = vpop.permute.xlu0 %921
    %923 = vrot.lane.b32.xlu0 %v71, 96
    %v924 = vpop.permute.xlu0 %923
    %925 = vrot.lane.b32.xlu0 %v73, 96
    %v926 = vpop.permute.xlu0 %925
    %v932 = vsel %vm88, %v64, 0
    %v935 = vsel %vm88, %v65, 0
    %937 = vmatpush.msra.mxu0 0.0
    %938 = vmatpush.msra.mxu0 0.0
    %939 = vmatpush.msra.mxu0 0.0
    %940 = vmatpush.msra.mxu0 0.0
    %941 = vmatpush.msra.mxu0 0.0
    %942 = vmatpush.msra.mxu0 0.0
    %943 = vmatpush.msra.mxu0 0.0
    %944 = vmatpush.msra.mxu0 0.0
    %945 = vmatpush.msra.mxu0 0.0
    %946 = vmatpush.msra.mxu0 0.0
    %947 = vmatpush.msra.mxu0 0.0
    %948 = vmatpush.msra.mxu0 0.0
    %949 = vmatpush.msra.mxu0 %v926
    %950 = vmatpush.msra.mxu0 %v924
    %951 = vmatpush.msra.mxu0 %v922
    %952 = vmatpush.msra.mxu0 %v920
    %953 = vmatmul.f32.gmra.mxu0 %v932
    %v954 = vpop.f32.mrf.mxu0
    %v955 = vadd.f32 0.0, %v954
    %956 = vmatmul.f32.gmra.mxu0 %v935
    %v957 = vpop.f32.mrf.mxu0
    %v958 = vadd.f32 0.0, %v957
    %959 = vdwg.mxu0
    %s960 = sld [smem:[#allocation3]]
    %v961 = vstv %s960
    %s962 = sld [smem:[#allocation3 + $0x1]]
    %v963 = vstv %s962
    %vm964 = vcmp.lt.s32.totalorder %v121, %v961
    %vm965 = vcmp.lt.s32.totalorder %v121, %v963
    %968 = vrot.lane.b32.xlu0 %v910, 120
    %v969 = vpop.permute.xlu0 %968
    %970 = vrot.lane.b32.xlu0 %v913, 120
    %v971 = vpop.permute.xlu0 %970
    %972 = vrot.lane.b32.xlu0 %v910, 112
    %v973 = vpop.permute.xlu0 %972
    %974 = vrot.lane.b32.xlu0 %v913, 112
    %v975 = vpop.permute.xlu0 %974
    %976 = vrot.lane.b32.xlu0 %v910, 104
    %v977 = vpop.permute.xlu0 %976
    %978 = vrot.lane.b32.xlu0 %v913, 104
    %v979 = vpop.permute.xlu0 %978
    %982 = vrot.lane.b32.xlu0 %v955, 120
    %v983 = vpop.permute.xlu0 %982
    %984 = vrot.lane.b32.xlu0 %v958, 120
    %v985 = vpop.permute.xlu0 %984
    %986 = vrot.lane.b32.xlu0 %v955, 112
    %v987 = vpop.permute.xlu0 %986
    %988 = vrot.lane.b32.xlu0 %v958, 112
    %v989 = vpop.permute.xlu0 %988
    %990 = vrot.lane.b32.xlu0 %v955, 104
    %v991 = vpop.permute.xlu0 %990
    %992 = vrot.lane.b32.xlu0 %v958, 104
    %v993 = vpop.permute.xlu0 %992
    %v994 = vsel %vm139, %v910, 0
    %v996 = vsel %vm139, %v955, 0
    %998 = vmatpush.xpose.msra.mxu0 0.0
    %999 = vmatpush.xpose.msra.mxu0 0.0
    %1000 = vmatpush.xpose.msra.mxu0 0.0
    %1001 = vmatpush.xpose.msra.mxu0 0.0
    %1002 = vmatpush.xpose.msra.mxu0 0.0
    %1003 = vmatpush.xpose.msra.mxu0 0.0
    %1004 = vmatpush.xpose.msra.mxu0 0.0
    %1005 = vmatpush.xpose.msra.mxu0 0.0
    %1006 = vmatpush.xpose.msra.mxu0 0.0
    %1007 = vmatpush.xpose.msra.mxu0 0.0
    %1008 = vmatpush.xpose.msra.mxu0 0.0
    %1009 = vmatpush.xpose.msra.mxu0 0.0
    %1010 = vmatpush.xpose.msra.mxu0 0.0
    %1011 = vmatpush.xpose.msra.mxu0 0.0
    %1012 = vmatpush.xpose.msra.mxu0 0.0
    %1013 = vmatpush.xpose.msra.mxu0 %v996
    %1014 = vmatmul.f32.gmra.mxu0 %v994
    %v1015 = vpop.f32.mrf.mxu0
    %v1016 = vadd.f32 0.0, %v1015
    %1017 = vdwg.mxu0
    %v1018 = vsel %vm139, %v913, 0
    %v1020 = vsel %vm139, %v958, 0
    %1022 = vmatpush.xpose.msra.mxu0 0.0
    %1023 = vmatpush.xpose.msra.mxu0 0.0
    %1024 = vmatpush.xpose.msra.mxu0 0.0
    %1025 = vmatpush.xpose.msra.mxu0 0.0
    %1026 = vmatpush.xpose.msra.mxu0 0.0
    %1027 = vmatpush.xpose.msra.mxu0 0.0
    %1028 = vmatpush.xpose.msra.mxu0 0.0
    %1029 = vmatpush.xpose.msra.mxu0 0.0
    %1030 = vmatpush.xpose.msra.mxu0 0.0
    %1031 = vmatpush.xpose.msra.mxu0 0.0
    %1032 = vmatpush.xpose.msra.mxu0 0.0
    %1033 = vmatpush.xpose.msra.mxu0 0.0
    %1034 = vmatpush.xpose.msra.mxu0 0.0
    %1035 = vmatpush.xpose.msra.mxu0 0.0
    %1036 = vmatpush.xpose.msra.mxu0 0.0
    %1037 = vmatpush.xpose.msra.mxu0 %v1020
    %1038 = vmatmul.f32.gmra.mxu0 %v1018
    %v1039 = vpop.f32.mrf.mxu0
    %v1040 = vadd.f32 0.0, %v1039
    %1041 = vdwg.mxu0
    %v1042 = vsel %vm139, %v969, 0
    %v1044 = vsel %vm139, %v983, 0
    %1046 = vmatpush.xpose.msra.mxu0 0.0
    %1047 = vmatpush.xpose.msra.mxu0 0.0
    %1048 = vmatpush.xpose.msra.mxu0 0.0
    %1049 = vmatpush.xpose.msra.mxu0 0.0
    %1050 = vmatpush.xpose.msra.mxu0 0.0
    %1051 = vmatpush.xpose.msra.mxu0 0.0
    %1052 = vmatpush.xpose.msra.mxu0 0.0
    %1053 = vmatpush.xpose.msra.mxu0 0.0
    %1054 = vmatpush.xpose.msra.mxu0 0.0
    %1055 = vmatpush.xpose.msra.mxu0 0.0
    %1056 = vmatpush.xpose.msra.mxu0 0.0
    %1057 = vmatpush.xpose.msra.mxu0 0.0
    %1058 = vmatpush.xpose.msra.mxu0 0.0
    %1059 = vmatpush.xpose.msra.mxu0 0.0
    %1060 = vmatpush.xpose.msra.mxu0 0.0
    %1061 = vmatpush.xpose.msra.mxu0 %v1044
    %1062 = vmatmul.f32.gmra.mxu0 %v1042
    %v1063 = vpop.f32.mrf.mxu0
    %v1064 = vadd.f32 0.0, %v1063
    %1065 = vdwg.mxu0
    %v1066 = vsel %vm139, %v971, 0
    %v1068 = vsel %vm139, %v985, 0
    %1070 = vmatpush.xpose.msra.mxu0 0.0
    %1071 = vmatpush.xpose.msra.mxu0 0.0
    %1072 = vmatpush.xpose.msra.mxu0 0.0
    %1073 = vmatpush.xpose.msra.mxu0 0.0
    %1074 = vmatpush.xpose.msra.mxu0 0.0
    %1075 = vmatpush.xpose.msra.mxu0 0.0
    %1076 = vmatpush.xpose.msra.mxu0 0.0
    %1077 = vmatpush.xpose.msra.mxu0 0.0
    %1078 = vmatpush.xpose.msra.mxu0 0.0
    %1079 = vmatpush.xpose.msra.mxu0 0.0
    %1080 = vmatpush.xpose.msra.mxu0 0.0
    %1081 = vmatpush.xpose.msra.mxu0 0.0
    %1082 = vmatpush.xpose.msra.mxu0 0.0
    %1083 = vmatpush.xpose.msra.mxu0 0.0
    %1084 = vmatpush.xpose.msra.mxu0 0.0
    %1085 = vmatpush.xpose.msra.mxu0 %v1068
    %1086 = vmatmul.f32.gmra.mxu0 %v1066
    %v1087 = vpop.f32.mrf.mxu0
    %v1088 = vadd.f32 0.0, %v1087
    %1089 = vdwg.mxu0
    %v1090 = vsel %vm139, %v973, 0
    %v1092 = vsel %vm139, %v987, 0
    %1094 = vmatpush.xpose.msra.mxu0 0.0
    %1095 = vmatpush.xpose.msra.mxu0 0.0
    %1096 = vmatpush.xpose.msra.mxu0 0.0
    %1097 = vmatpush.xpose.msra.mxu0 0.0
    %1098 = vmatpush.xpose.msra.mxu0 0.0
    %1099 = vmatpush.xpose.msra.mxu0 0.0
    %1100 = vmatpush.xpose.msra.mxu0 0.0
    %1101 = vmatpush.xpose.msra.mxu0 0.0
    %1102 = vmatpush.xpose.msra.mxu0 0.0
    %1103 = vmatpush.xpose.msra.mxu0 0.0
    %1104 = vmatpush.xpose.msra.mxu0 0.0
    %1105 = vmatpush.xpose.msra.mxu0 0.0
    %1106 = vmatpush.xpose.msra.mxu0 0.0
    %1107 = vmatpush.xpose.msra.mxu0 0.0
    %1108 = vmatpush.xpose.msra.mxu0 0.0
    %1109 = vmatpush.xpose.msra.mxu0 %v1092
    %1110 = vmatmul.f32.gmra.mxu0 %v1090
    %v1111 = vpop.f32.mrf.mxu0
    %v1112 = vadd.f32 0.0, %v1111
    %1113 = vdwg.mxu0
    %v1114 = vsel %vm139, %v975, 0
    %v1116 = vsel %vm139, %v989, 0
    %1118 = vmatpush.xpose.msra.mxu0 0.0
    %1119 = vmatpush.xpose.msra.mxu0 0.0
    %1120 = vmatpush.xpose.msra.mxu0 0.0
    %1121 = vmatpush.xpose.msra.mxu0 0.0
    %1122 = vmatpush.xpose.msra.mxu0 0.0
    %1123 = vmatpush.xpose.msra.mxu0 0.0
    %1124 = vmatpush.xpose.msra.mxu0 0.0
    %1125 = vmatpush.xpose.msra.mxu0 0.0
    %1126 = vmatpush.xpose.msra.mxu0 0.0
    %1127 = vmatpush.xpose.msra.mxu0 0.0
    %1128 = vmatpush.xpose.msra.mxu0 0.0
    %1129 = vmatpush.xpose.msra.mxu0 0.0
    %1130 = vmatpush.xpose.msra.mxu0 0.0
    %1131 = vmatpush.xpose.msra.mxu0 0.0
    %1132 = vmatpush.xpose.msra.mxu0 0.0
    %1133 = vmatpush.xpose.msra.mxu0 %v1116
    %1134 = vmatmul.f32.gmra.mxu0 %v1114
    %v1135 = vpop.f32.mrf.mxu0
    %v1136 = vadd.f32 0.0, %v1135
    %1137 = vdwg.mxu0
    %v1138 = vsel %vm139, %v977, 0
    %v1140 = vsel %vm139, %v991, 0
    %1142 = vmatpush.xpose.msra.mxu0 0.0
    %1143 = vmatpush.xpose.msra.mxu0 0.0
    %1144 = vmatpush.xpose.msra.mxu0 0.0
    %1145 = vmatpush.xpose.msra.mxu0 0.0
    %1146 = vmatpush.xpose.msra.mxu0 0.0
    %1147 = vmatpush.xpose.msra.mxu0 0.0
    %1148 = vmatpush.xpose.msra.mxu0 0.0
    %1149 = vmatpush.xpose.msra.mxu0 0.0
    %1150 = vmatpush.xpose.msra.mxu0 0.0
    %1151 = vmatpush.xpose.msra.mxu0 0.0
    %1152 = vmatpush.xpose.msra.mxu0 0.0
    %1153 = vmatpush.xpose.msra.mxu0 0.0
    %1154 = vmatpush.xpose.msra.mxu0 0.0
    %1155 = vmatpush.xpose.msra.mxu0 0.0
    %1156 = vmatpush.xpose.msra.mxu0 0.0
    %1157 = vmatpush.xpose.msra.mxu0 %v1140
    %1158 = vmatmul.f32.gmra.mxu0 %v1138
    %v1159 = vpop.f32.mrf.mxu0
    %v1160 = vadd.f32 0.0, %v1159
    %1161 = vdwg.mxu0
    %v1162 = vsel %vm139, %v979, 0
    %v1164 = vsel %vm139, %v993, 0
    %1166 = vmatpush.xpose.msra.mxu0 0.0
    %1167 = vmatpush.xpose.msra.mxu0 0.0
    %1168 = vmatpush.xpose.msra.mxu0 0.0
    %1169 = vmatpush.xpose.msra.mxu0 0.0
    %1170 = vmatpush.xpose.msra.mxu0 0.0
    %1171 = vmatpush.xpose.msra.mxu0 0.0
    %1172 = vmatpush.xpose.msra.mxu0 0.0
    %1173 = vmatpush.xpose.msra.mxu0 0.0
    %1174 = vmatpush.xpose.msra.mxu0 0.0
    %1175 = vmatpush.xpose.msra.mxu0 0.0
    %1176 = vmatpush.xpose.msra.mxu0 0.0
    %1177 = vmatpush.xpose.msra.mxu0 0.0
    %1178 = vmatpush.xpose.msra.mxu0 0.0
    %1179 = vmatpush.xpose.msra.mxu0 0.0
    %1180 = vmatpush.xpose.msra.mxu0 0.0
    %1181 = vmatpush.xpose.msra.mxu0 %v1164
    %1182 = vmatmul.f32.gmra.mxu0 %v1162
    %v1183 = vpop.f32.mrf.mxu0
    %v1184 = vadd.f32 0.0, %v1183
    %1185 = vdwg.mxu0
    %v1186 = vsel %vm964, 1, 0
    %v1187 = vsel %vm965, 1, 0
    %vm1188 = vcmp.eq.s32.totalorder %v1186, 1
    %vm1189 = vcmp.eq.s32.totalorder %v1187, 1
    %v1190 = vsel %vm1188, %v1016, -1000000.0
    %v1191 = vsel %vm1189, %v1040, -1000000.0
    %v1192 = vsel %vm1188, %v1064, -1000000.0
    %v1193 = vsel %vm1189, %v1088, -1000000.0
    %v1194 = vsel %vm1188, %v1112, -1000000.0
    %v1195 = vsel %vm1189, %v1136, -1000000.0
    %v1196 = vsel %vm1188, %v1160, -1000000.0
    %v1197 = vsel %vm1189, %v1184, -1000000.0
    %v1198 = vsel %vm139, %v1190, -inf
    %1199 = vmax.xlane.f32.xlu0 %v1198
    %v1200 = vpop.xlane.xlu0 %1199
    %v1201 = vsel %vm139, %v1191, -inf
    %1202 = vmax.xlane.f32.xlu0 %v1201
    %v1203 = vpop.xlane.xlu0 %1202
    %v1204 = vsel %vm139, %v1192, -inf
    %1205 = vmax.xlane.f32.xlu0 %v1204
    %v1206 = vpop.xlane.xlu0 %1205
    %v1207 = vsel %vm139, %v1193, -inf
    %1208 = vmax.xlane.f32.xlu0 %v1207
    %v1209 = vpop.xlane.xlu0 %1208
    %v1210 = vsel %vm139, %v1194, -inf
    %1211 = vmax.xlane.f32.xlu0 %v1210
    %v1212 = vpop.xlane.xlu0 %1211
    %v1213 = vsel %vm139, %v1195, -inf
    %1214 = vmax.xlane.f32.xlu0 %v1213
    %v1215 = vpop.xlane.xlu0 %1214
    %v1216 = vsel %vm139, %v1196, -inf
    %1217 = vmax.xlane.f32.xlu0 %v1216
    %v1218 = vpop.xlane.xlu0 %1217
    %v1219 = vsel %vm139, %v1197, -inf
    %1220 = vmax.xlane.f32.xlu0 %v1219
    %v1221 = vpop.xlane.xlu0 %1220
    %v1222 = vsub.f32 %v1190, %v1200
    %v1223 = vsub.f32 %v1191, %v1203
    %v1224 = vsub.f32 %v1192, %v1206
    %v1225 = vsub.f32 %v1193, %v1209
    %v1226 = vsub.f32 %v1194, %v1212
    %v1227 = vsub.f32 %v1195, %v1215
    %v1228 = vsub.f32 %v1196, %v1218
    %v1229 = vsub.f32 %v1197, %v1221
    %v1230 = vmul.f32 %v1222, 1.442695
    %v1231 = vpow.pop %v1230
    %v1232 = vmul.f32 %v1223, 1.442695
    %v1233 = vpow.pop %v1232
    %v1234 = vmul.f32 %v1224, 1.442695
    %v1235 = vpow.pop %v1234
    %v1236 = vmul.f32 %v1225, 1.442695
    %v1237 = vpow.pop %v1236
    %v1238 = vmul.f32 %v1226, 1.442695
    %v1239 = vpow.pop %v1238
    %v1240 = vmul.f32 %v1227, 1.442695
    %v1241 = vpow.pop %v1240
    %v1242 = vmul.f32 %v1228, 1.442695
    %v1243 = vpow.pop %v1242
    %v1244 = vmul.f32 %v1229, 1.442695
    %v1245 = vpow.pop %v1244
    %v1246 = vsel %vm139, %v1231, 0.0
    %1247 = vadd.xlane.f32.xlu0 %v1246
    %v1248 = vpop.xlane.xlu0 %1247
    %v1249 = vsel %vm139, %v1233, 0.0
    %1250 = vadd.xlane.f32.xlu0 %v1249
    %v1251 = vpop.xlane.xlu0 %1250
    %v1252 = vsel %vm139, %v1235, 0.0
    %1253 = vadd.xlane.f32.xlu0 %v1252
    %v1254 = vpop.xlane.xlu0 %1253
    %v1255 = vsel %vm139, %v1237, 0.0
    %1256 = vadd.xlane.f32.xlu0 %v1255
    %v1257 = vpop.xlane.xlu0 %1256
    %v1258 = vsel %vm139, %v1239, 0.0
    %1259 = vadd.xlane.f32.xlu0 %v1258
    %v1260 = vpop.xlane.xlu0 %1259
    %v1261 = vsel %vm139, %v1241, 0.0
    %1262 = vadd.xlane.f32.xlu0 %v1261
    %v1263 = vpop.xlane.xlu0 %1262
    %v1264 = vsel %vm139, %v1243, 0.0
    %1265 = vadd.xlane.f32.xlu0 %v1264
    %v1266 = vpop.xlane.xlu0 %1265
    %v1267 = vsel %vm139, %v1245, 0.0
    %1268 = vadd.xlane.f32.xlu0 %v1267
    %v1269 = vpop.xlane.xlu0 %1268
    %v1270 = vrcp.pop %v1248
    %v1271 = vmul.f32 %v1248, %v1270
    %v1272 = vsub.f32 1.0, %v1271
    %v1273 = vmul.f32 %v1270, %v1272
    %v1274 = vadd.f32 %v1270, %v1273
    %vm1275 = vweird.f32 %v1248
    %vm1276 = vweird.f32 %v1270
    %vm1277 = vmor %vm1275, %vm1276
    %v1278 = vsel %vm1277, %v1270, %v1274
    %v1279 = vand.u32 2147483647, %v1248
    %vm1280 = vcmp.eq.f32.partialorder %v1279, 8.507059e+37
    %v1281 = vand.u32 %v1248, 2147483648
    %v1282 = vor.u32 1.1754944e-38, %v1281
    %v1283 = vsel %vm1280, %v1282, %v1278
    %v1284 = vmul.f32 %v1231, %v1283
    %v1285 = vrcp.pop %v1251
    %v1286 = vmul.f32 %v1251, %v1285
    %v1287 = vsub.f32 1.0, %v1286
    %v1288 = vmul.f32 %v1285, %v1287
    %v1289 = vadd.f32 %v1285, %v1288
    %vm1290 = vweird.f32 %v1251
    %vm1291 = vweird.f32 %v1285
    %vm1292 = vmor %vm1290, %vm1291
    %v1293 = vsel %vm1292, %v1285, %v1289
    %v1294 = vand.u32 2147483647, %v1251
    %vm1295 = vcmp.eq.f32.partialorder %v1294, 8.507059e+37
    %v1296 = vand.u32 %v1251, 2147483648
    %v1297 = vor.u32 1.1754944e-38, %v1296
    %v1298 = vsel %vm1295, %v1297, %v1293
    %v1299 = vmul.f32 %v1233, %v1298
    %v1300 = vrcp.pop %v1254
    %v1301 = vmul.f32 %v1254, %v1300
    %v1302 = vsub.f32 1.0, %v1301
    %v1303 = vmul.f32 %v1300, %v1302
    %v1304 = vadd.f32 %v1300, %v1303
    %vm1305 = vweird.f32 %v1254
    %vm1306 = vweird.f32 %v1300
    %vm1307 = vmor %vm1305, %vm1306
    %v1308 = vsel %vm1307, %v1300, %v1304
    %v1309 = vand.u32 2147483647, %v1254
    %vm1310 = vcmp.eq.f32.partialorder %v1309, 8.507059e+37
    %v1311 = vand.u32 %v1254, 2147483648
    %v1312 = vor.u32 1.1754944e-38, %v1311
    %v1313 = vsel %vm1310, %v1312, %v1308
    %v1314 = vmul.f32 %v1235, %v1313
    %v1315 = vrcp.pop %v1257
    %v1316 = vmul.f32 %v1257, %v1315
    %v1317 = vsub.f32 1.0, %v1316
    %v1318 = vmul.f32 %v1315, %v1317
    %v1319 = vadd.f32 %v1315, %v1318
    %vm1320 = vweird.f32 %v1257
    %vm1321 = vweird.f32 %v1315
    %vm1322 = vmor %vm1320, %vm1321
    %v1323 = vsel %vm1322, %v1315, %v1319
    %v1324 = vand.u32 2147483647, %v1257
    %vm1325 = vcmp.eq.f32.partialorder %v1324, 8.507059e+37
    %v1326 = vand.u32 %v1257, 2147483648
    %v1327 = vor.u32 1.1754944e-38, %v1326
    %v1328 = vsel %vm1325, %v1327, %v1323
    %v1329 = vmul.f32 %v1237, %v1328
    %v1330 = vrcp.pop %v1260
    %v1331 = vmul.f32 %v1260, %v1330
    %v1332 = vsub.f32 1.0, %v1331
    %v1333 = vmul.f32 %v1330, %v1332
    %v1334 = vadd.f32 %v1330, %v1333
    %vm1335 = vweird.f32 %v1260
    %vm1336 = vweird.f32 %v1330
    %vm1337 = vmor %vm1335, %vm1336
    %v1338 = vsel %vm1337, %v1330, %v1334
    %v1339 = vand.u32 2147483647, %v1260
    %vm1340 = vcmp.eq.f32.partialorder %v1339, 8.507059e+37
    %v1341 = vand.u32 %v1260, 2147483648
    %v1342 = vor.u32 1.1754944e-38, %v1341
    %v1343 = vsel %vm1340, %v1342, %v1338
    %v1344 = vmul.f32 %v1239, %v1343
    %v1345 = vrcp.pop %v1263
    %v1346 = vmul.f32 %v1263, %v1345
    %v1347 = vsub.f32 1.0, %v1346
    %v1348 = vmul.f32 %v1345, %v1347
    %v1349 = vadd.f32 %v1345, %v1348
    %vm1350 = vweird.f32 %v1263
    %vm1351 = vweird.f32 %v1345
    %vm1352 = vmor %vm1350, %vm1351
    %v1353 = vsel %vm1352, %v1345, %v1349
    %v1354 = vand.u32 2147483647, %v1263
    %vm1355 = vcmp.eq.f32.partialorder %v1354, 8.507059e+37
    %v1356 = vand.u32 %v1263, 2147483648
    %v1357 = vor.u32 1.1754944e-38, %v1356
    %v1358 = vsel %vm1355, %v1357, %v1353
    %v1359 = vmul.f32 %v1241, %v1358
    %v1360 = vrcp.pop %v1266
    %v1361 = vmul.f32 %v1266, %v1360
    %v1362 = vsub.f32 1.0, %v1361
    %v1363 = vmul.f32 %v1360, %v1362
    %v1364 = vadd.f32 %v1360, %v1363
    %vm1365 = vweird.f32 %v1266
    %vm1366 = vweird.f32 %v1360
    %vm1367 = vmor %vm1365, %vm1366
    %v1368 = vsel %vm1367, %v1360, %v1364
    %v1369 = vand.u32 2147483647, %v1266
    %vm1370 = vcmp.eq.f32.partialorder %v1369, 8.507059e+37
    %v1371 = vand.u32 %v1266, 2147483648
    %v1372 = vor.u32 1.1754944e-38, %v1371
    %v1373 = vsel %vm1370, %v1372, %v1368
    %v1374 = vmul.f32 %v1243, %v1373
    %v1375 = vrcp.pop %v1269
    %v1376 = vmul.f32 %v1269, %v1375
    %v1377 = vsub.f32 1.0, %v1376
    %v1378 = vmul.f32 %v1375, %v1377
    %v1379 = vadd.f32 %v1375, %v1378
    %vm1380 = vweird.f32 %v1269
    %vm1381 = vweird.f32 %v1375
    %vm1382 = vmor %vm1380, %vm1381
    %v1383 = vsel %vm1382, %v1375, %v1379
    %v1384 = vand.u32 2147483647, %v1269
    %vm1385 = vcmp.eq.f32.partialorder %v1384, 8.507059e+37
    %v1386 = vand.u32 %v1269, 2147483648
    %v1387 = vor.u32 1.1754944e-38, %v1386
    %v1388 = vsel %vm1385, %v1387, %v1383
    %v1389 = vmul.f32 %v1245, %v1388
    %1390 = vrot.lane.b32.xlu0 %v955, 96
    %v1391 = vpop.permute.xlu0 %1390
    %v1394 = vsel %vm139, %v1284, 0
    %1396 = vmatpush.msra.mxu0 0.0
    %1397 = vmatpush.msra.mxu0 0.0
    %1398 = vmatpush.msra.mxu0 0.0
    %1399 = vmatpush.msra.mxu0 0.0
    %1400 = vmatpush.msra.mxu0 0.0
    %1401 = vmatpush.msra.mxu0 0.0
    %1402 = vmatpush.msra.mxu0 0.0
    %1403 = vmatpush.msra.mxu0 0.0
    %1404 = vmatpush.msra.mxu0 0.0
    %1405 = vmatpush.msra.mxu0 0.0
    %1406 = vmatpush.msra.mxu0 0.0
    %1407 = vmatpush.msra.mxu0 0.0
    %1408 = vmatpush.msra.mxu0 0.0
    %1409 = vmatpush.msra.mxu0 0.0
    %1410 = vmatpush.msra.mxu0 0.0
    %1411 = vmatpush.msra.mxu0 %v1391
    %1412 = vmatmul.f32.gmra.mxu0 %v1394
    %v1413 = vpop.f32.mrf.mxu0
    %v1414 = vadd.f32 0.0, %v1413
    %1415 = vdwg.mxu0
    %1416 = vrot.lane.b32.xlu0 %v958, 96
    %v1417 = vpop.permute.xlu0 %1416
    %v1420 = vsel %vm139, %v1299, 0
    %1422 = vmatpush.msra.mxu0 0.0
    %1423 = vmatpush.msra.mxu0 0.0
    %1424 = vmatpush.msra.mxu0 0.0
    %1425 = vmatpush.msra.mxu0 0.0
    %1426 = vmatpush.msra.mxu0 0.0
    %1427 = vmatpush.msra.mxu0 0.0
    %1428 = vmatpush.msra.mxu0 0.0
    %1429 = vmatpush.msra.mxu0 0.0
    %1430 = vmatpush.msra.mxu0 0.0
    %1431 = vmatpush.msra.mxu0 0.0
    %1432 = vmatpush.msra.mxu0 0.0
    %1433 = vmatpush.msra.mxu0 0.0
    %1434 = vmatpush.msra.mxu0 0.0
    %1435 = vmatpush.msra.mxu0 0.0
    %1436 = vmatpush.msra.mxu0 0.0
    %1437 = vmatpush.msra.mxu0 %v1417
    %1438 = vmatmul.f32.gmra.mxu0 %v1420
    %v1439 = vpop.f32.mrf.mxu0
    %v1440 = vadd.f32 0.0, %v1439
    %1441 = vdwg.mxu0
    %1442 = vrot.lane.b32.xlu0 %v983, 96
    %v1443 = vpop.permute.xlu0 %1442
    %v1446 = vsel %vm139, %v1314, 0
    %1448 = vmatpush.msra.mxu0 0.0
    %1449 = vmatpush.msra.mxu0 0.0
    %1450 = vmatpush.msra.mxu0 0.0
    %1451 = vmatpush.msra.mxu0 0.0
    %1452 = vmatpush.msra.mxu0 0.0
    %1453 = vmatpush.msra.mxu0 0.0
    %1454 = vmatpush.msra.mxu0 0.0
    %1455 = vmatpush.msra.mxu0 0.0
    %1456 = vmatpush.msra.mxu0 0.0
    %1457 = vmatpush.msra.mxu0 0.0
    %1458 = vmatpush.msra.mxu0 0.0
    %1459 = vmatpush.msra.mxu0 0.0
    %1460 = vmatpush.msra.mxu0 0.0
    %1461 = vmatpush.msra.mxu0 0.0
    %1462 = vmatpush.msra.mxu0 0.0
    %1463 = vmatpush.msra.mxu0 %v1443
    %1464 = vmatmul.f32.gmra.mxu0 %v1446
    %v1465 = vpop.f32.mrf.mxu0
    %v1466 = vadd.f32 0.0, %v1465
    %1467 = vdwg.mxu0
    %1468 = vrot.lane.b32.xlu0 %v985, 96
    %v1469 = vpop.permute.xlu0 %1468
    %v1472 = vsel %vm139, %v1329, 0
    %1474 = vmatpush.msra.mxu0 0.0
    %1475 = vmatpush.msra.mxu0 0.0
    %1476 = vmatpush.msra.mxu0 0.0
    %1477 = vmatpush.msra.mxu0 0.0
    %1478 = vmatpush.msra.mxu0 0.0
    %1479 = vmatpush.msra.mxu0 0.0
    %1480 = vmatpush.msra.mxu0 0.0
    %1481 = vmatpush.msra.mxu0 0.0
    %1482 = vmatpush.msra.mxu0 0.0
    %1483 = vmatpush.msra.mxu0 0.0
    %1484 = vmatpush.msra.mxu0 0.0
    %1485 = vmatpush.msra.mxu0 0.0
    %1486 = vmatpush.msra.mxu0 0.0
    %1487 = vmatpush.msra.mxu0 0.0
    %1488 = vmatpush.msra.mxu0 0.0
    %1489 = vmatpush.msra.mxu0 %v1469
    %1490 = vmatmul.f32.gmra.mxu0 %v1472
    %v1491 = vpop.f32.mrf.mxu0
    %v1492 = vadd.f32 0.0, %v1491
    %1493 = vdwg.mxu0
    %1494 = vrot.lane.b32.xlu0 %v987, 96
    %v1495 = vpop.permute.xlu0 %1494
    %v1498 = vsel %vm139, %v1344, 0
    %1500 = vmatpush.msra.mxu0 0.0
    %1501 = vmatpush.msra.mxu0 0.0
    %1502 = vmatpush.msra.mxu0 0.0
    %1503 = vmatpush.msra.mxu0 0.0
    %1504 = vmatpush.msra.mxu0 0.0
    %1505 = vmatpush.msra.mxu0 0.0
    %1506 = vmatpush.msra.mxu0 0.0
    %1507 = vmatpush.msra.mxu0 0.0
    %1508 = vmatpush.msra.mxu0 0.0
    %1509 = vmatpush.msra.mxu0 0.0
    %1510 = vmatpush.msra.mxu0 0.0
    %1511 = vmatpush.msra.mxu0 0.0
    %1512 = vmatpush.msra.mxu0 0.0
    %1513 = vmatpush.msra.mxu0 0.0
    %1514 = vmatpush.msra.mxu0 0.0
    %1515 = vmatpush.msra.mxu0 %v1495
    %1516 = vmatmul.f32.gmra.mxu0 %v1498
    %v1517 = vpop.f32.mrf.mxu0
    %v1518 = vadd.f32 0.0, %v1517
    %1519 = vdwg.mxu0
    %1520 = vrot.lane.b32.xlu0 %v989, 96
    %v1521 = vpop.permute.xlu0 %1520
    %v1524 = vsel %vm139, %v1359, 0
    %1526 = vmatpush.msra.mxu0 0.0
    %1527 = vmatpush.msra.mxu0 0.0
    %1528 = vmatpush.msra.mxu0 0.0
    %1529 = vmatpush.msra.mxu0 0.0
    %1530 = vmatpush.msra.mxu0 0.0
    %1531 = vmatpush.msra.mxu0 0.0
    %1532 = vmatpush.msra.mxu0 0.0
    %1533 = vmatpush.msra.mxu0 0.0
    %1534 = vmatpush.msra.mxu0 0.0
    %1535 = vmatpush.msra.mxu0 0.0
    %1536 = vmatpush.msra.mxu0 0.0
    %1537 = vmatpush.msra.mxu0 0.0
    %1538 = vmatpush.msra.mxu0 0.0
    %1539 = vmatpush.msra.mxu0 0.0
    %1540 = vmatpush.msra.mxu0 0.0
    %1541 = vmatpush.msra.mxu0 %v1521
    %1542 = vmatmul.f32.gmra.mxu0 %v1524
    %v1543 = vpop.f32.mrf.mxu0
    %v1544 = vadd.f32 0.0, %v1543
    %1545 = vdwg.mxu0
    %1546 = vrot.lane.b32.xlu0 %v991, 96
    %v1547 = vpop.permute.xlu0 %1546
    %v1550 = vsel %vm139, %v1374, 0
    %1552 = vmatpush.msra.mxu0 0.0
    %1553 = vmatpush.msra.mxu0 0.0
    %1554 = vmatpush.msra.mxu0 0.0
    %1555 = vmatpush.msra.mxu0 0.0
    %1556 = vmatpush.msra.mxu0 0.0
    %1557 = vmatpush.msra.mxu0 0.0
    %1558 = vmatpush.msra.mxu0 0.0
    %1559 = vmatpush.msra.mxu0 0.0
    %1560 = vmatpush.msra.mxu0 0.0
    %1561 = vmatpush.msra.mxu0 0.0
    %1562 = vmatpush.msra.mxu0 0.0
    %1563 = vmatpush.msra.mxu0 0.0
    %1564 = vmatpush.msra.mxu0 0.0
    %1565 = vmatpush.msra.mxu0 0.0
    %1566 = vmatpush.msra.mxu0 0.0
    %1567 = vmatpush.msra.mxu0 %v1547
    %1568 = vmatmul.f32.gmra.mxu0 %v1550
    %v1569 = vpop.f32.mrf.mxu0
    %v1570 = vadd.f32 0.0, %v1569
    %1571 = vdwg.mxu0
    %1572 = vrot.lane.b32.xlu0 %v993, 96
    %v1573 = vpop.permute.xlu0 %1572
    %v1576 = vsel %vm139, %v1389, 0
    %1578 = vmatpush.msra.mxu0 0.0
    %1579 = vmatpush.msra.mxu0 0.0
    %1580 = vmatpush.msra.mxu0 0.0
    %1581 = vmatpush.msra.mxu0 0.0
    %1582 = vmatpush.msra.mxu0 0.0
    %1583 = vmatpush.msra.mxu0 0.0
    %1584 = vmatpush.msra.mxu0 0.0
    %1585 = vmatpush.msra.mxu0 0.0
    %1586 = vmatpush.msra.mxu0 0.0
    %1587 = vmatpush.msra.mxu0 0.0
    %1588 = vmatpush.msra.mxu0 0.0
    %1589 = vmatpush.msra.mxu0 0.0
    %1590 = vmatpush.msra.mxu0 0.0
    %1591 = vmatpush.msra.mxu0 0.0
    %1592 = vmatpush.msra.mxu0 0.0
    %1593 = vmatpush.msra.mxu0 %v1573
    %1594 = vmatmul.f32.gmra.mxu0 %v1576
    %v1595 = vpop.f32.mrf.mxu0
    %v1596 = vadd.f32 0.0, %v1595
    %1597 = vdwg.mxu0
    %1600 = vrot.lane.b32.xlu0 %v1466, 8
    %v1601 = vpop.permute.xlu0 %1600
    %1602 = vrot.lane.b32.xlu0 %v1492, 8
    %v1603 = vpop.permute.xlu0 %1602
    %1608 = vrot.lane.b32.xlu0 %v1518, 16
    %v1609 = vpop.permute.xlu0 %1608
    %1610 = vrot.lane.b32.xlu0 %v1544, 16
    %v1611 = vpop.permute.xlu0 %1610
    %1616 = vrot.lane.b32.xlu0 %v1570, 24
    %v1617 = vpop.permute.xlu0 %1616
    %1618 = vrot.lane.b32.xlu0 %v1596, 24
    %v1619 = vpop.permute.xlu0 %1618
    %v1622 = vsel %vm139, %v1414, %v1601
    %v1623 = vsel %vm139, %v1440, %v1603
    %v1624 = vsel %vm782, %v1622, %v1609
    %v1625 = vsel %vm782, %v1623, %v1611
    %v1626 = vsel %vm785, %v1624, %v1617
    %v1627 = vsel %vm785, %v1625, %v1619
    %1628 = vrot.lane.b32.xlu0 %v67, 32
    %v1629 = vpop.permute.xlu0 %1628
    %1630 = vrot.lane.b32.xlu0 %v69, 32
    %v1631 = vpop.permute.xlu0 %1630
    %1632 = vrot.lane.b32.xlu0 %v71, 32
    %v1633 = vpop.permute.xlu0 %1632
    %1634 = vrot.lane.b32.xlu0 %v73, 32
    %v1635 = vpop.permute.xlu0 %1634
    %v1641 = vsel %vm88, %v1626, 0
    %v1644 = vsel %vm88, %v1627, 0
    %1646 = vmatpush.msra.mxu0 0.0
    %1647 = vmatpush.msra.mxu0 0.0
    %1648 = vmatpush.msra.mxu0 0.0
    %1649 = vmatpush.msra.mxu0 0.0
    %1650 = vmatpush.msra.mxu0 0.0
    %1651 = vmatpush.msra.mxu0 0.0
    %1652 = vmatpush.msra.mxu0 0.0
    %1653 = vmatpush.msra.mxu0 0.0
    %1654 = vmatpush.msra.mxu0 0.0
    %1655 = vmatpush.msra.mxu0 0.0
    %1656 = vmatpush.msra.mxu0 0.0
    %1657 = vmatpush.msra.mxu0 0.0
    %1658 = vmatpush.msra.mxu0 %v1635
    %1659 = vmatpush.msra.mxu0 %v1633
    %1660 = vmatpush.msra.mxu0 %v1631
    %1661 = vmatpush.msra.mxu0 %v1629
    %1662 = vmatmul.f32.gmra.mxu0 %v1641
    %v1663 = vpop.f32.mrf.mxu0
    %v1664 = vadd.f32 0.0, %v1663
    %1665 = vmatmul.f32.gmra.mxu0 %v1644
    %v1666 = vpop.f32.mrf.mxu0
    %v1667 = vadd.f32 0.0, %v1666
    %1668 = vdwg.mxu0
    %v1669 = vadd.f32 %v884, %v1664
    %v1670 = vadd.f32 %v885, %v1667
    %v1671 = vsel %vm88, %v1669, 0.0
    %1672 = vadd.xlane.f32.xlu0 %v1671
    %v1673 = vpop.xlane.xlu0 %1672
    %v1674 = vsel %vm88, %v1670, 0.0
    %1675 = vadd.xlane.f32.xlu0 %v1674
    %v1676 = vpop.xlane.xlu0 %1675
    %v1677 = vmul.f32 %v1673, %v847
    %v1678 = vmul.f32 %v1676, %v847
    %v1679 = vsub.f32 %v1669, %v1677
    %v1680 = vsub.f32 %v1670, %v1678
    %v1681 = vmul.f32 %v1679, %v1679
    %v1682 = vmul.f32 %v1680, %v1680
    %v1683 = vsel %vm88, %v1681, 0.0
    %1684 = vadd.xlane.f32.xlu0 %v1683
    %v1685 = vpop.xlane.xlu0 %1684
    %v1686 = vsel %vm88, %v1682, 0.0
    %1687 = vadd.xlane.f32.xlu0 %v1686
    %v1688 = vpop.xlane.xlu0 %1687
    %v1689 = vmul.f32 %v1685, %v847
    %v1690 = vmul.f32 %v1688, %v847
    %v1691 = vadd.f32 %v1689, 1e-05
    %v1692 = vadd.f32 %v1690, 1e-05
    %v1693 = vrsqrt.pop %v1691
    %v1694 = vmul.f32 %v1693, %v1691
    %v1695 = vmul.f32 %v1694, %v1693
    %v1696 = vmul.f32 0.5, %v1695
    %v1697 = vsub.f32 1.5, %v1696
    %v1698 = vmul.f32 %v1693, %v1697
    %vm1699 = vweird.f32 %v1691
    %vm1700 = vweird.f32 %v1693
    %vm1701 = vmor %vm1699, %vm1700
    %v1702 = vsel %vm1701, %v1693, %v1698
    %v1703 = vrsqrt.pop %v1692
    %v1704 = vmul.f32 %v1703, %v1692
    %v1705 = vmul.f32 %v1704, %v1703
    %v1706 = vmul.f32 0.5, %v1705
    %v1707 = vsub.f32 1.5, %v1706
    %v1708 = vmul.f32 %v1703, %v1707
    %vm1709 = vweird.f32 %v1692
    %vm1710 = vweird.f32 %v1703
    %vm1711 = vmor %vm1709, %vm1710
    %v1712 = vsel %vm1711, %v1703, %v1708
    %v1713 = vmul.f32 %v1679, %v1702
    %v1714 = vmul.f32 %v1680, %v1712
    %v1715 = vperm.slane %v78, 0
    %v1717 = vsel %vm88, %v1713, 0
    %v1720 = vsel %vm88, %v1714, 0
    %1722 = vmatpush.msra.mxu0 0.0
    %1723 = vmatpush.msra.mxu0 0.0
    %1724 = vmatpush.msra.mxu0 0.0
    %1725 = vmatpush.msra.mxu0 0.0
    %1726 = vmatpush.msra.mxu0 0.0
    %1727 = vmatpush.msra.mxu0 0.0
    %1728 = vmatpush.msra.mxu0 0.0
    %1729 = vmatpush.msra.mxu0 0.0
    %1730 = vmatpush.msra.mxu0 0.0
    %1731 = vmatpush.msra.mxu0 0.0
    %1732 = vmatpush.msra.mxu0 0.0
    %1733 = vmatpush.msra.mxu0 0.0
    %1734 = vmatpush.msra.mxu0 %v77
    %1735 = vmatpush.msra.mxu0 %v76
    %1736 = vmatpush.msra.mxu0 %v75
    %1737 = vmatpush.msra.mxu0 %v74
    %1738 = vmatmul.f32.gmra.mxu0 %v1717
    %v1739 = vpop.f32.mrf.mxu0
    %v1740 = vadd.f32 %v1715, %v1739
    %1741 = vmatmul.f32.gmra.mxu0 %v1720
    %v1742 = vpop.f32.mrf.mxu0
    %v1743 = vadd.f32 %v1715, %v1742
    %1744 = vdwg.mxu0
    %v1745 = vmax.f32 %v1740, 0.0
    %v1746 = vmax.f32 %v1743, 0.0
    %v1747 = vperm.slane %v87, 0
    %vm1748 = vcmask 523264
    %v1750 = vsel %vm1748, %v1745, 0
    %v1753 = vsel %vm1748, %v1746, 0
    %1755 = vmatpush.msra.mxu0 0.0
    %1756 = vmatpush.msra.mxu0 0.0
    %1757 = vmatpush.msra.mxu0 0.0
    %1758 = vmatpush.msra.mxu0 0.0
    %1759 = vmatpush.msra.mxu0 0.0
    %1760 = vmatpush.msra.mxu0 0.0
    %1761 = vmatpush.msra.mxu0 0.0
    %1762 = vmatpush.msra.mxu0 0.0
    %1763 = vmatpush.msra.mxu0 %v86
    %1764 = vmatpush.msra.mxu0 %v85
    %1765 = vmatpush.msra.mxu0 %v84
    %1766 = vmatpush.msra.mxu0 %v83
    %1767 = vmatpush.msra.mxu0 %v82
    %1768 = vmatpush.msra.mxu0 %v81
    %1769 = vmatpush.msra.mxu0 %v80
    %1770 = vmatpush.msra.mxu0 %v79
    %1771 = vmatmul.f32.gmra.mxu0 %v1750
    %v1772 = vpop.f32.mrf.mxu0
    %v1773 = vadd.f32 %v1747, %v1772
    %1774 = vmatmul.f32.gmra.mxu0 %v1753
    %v1775 = vpop.f32.mrf.mxu0
    %v1776 = vadd.f32 %v1747, %v1775
    %1777 = vdwg.mxu0
    %v1778 = vadd.f32 %v1713, %v1773
    %v1779 = vadd.f32 %v1714, %v1776
    %v1780 = vsel %vm88, %v1778, 0.0
    %1781 = vadd.xlane.f32.xlu0 %v1780
    %v1782 = vpop.xlane.xlu0 %1781
    %v1783 = vsel %vm88, %v1779, 0.0
    %1784 = vadd.xlane.f32.xlu0 %v1783
    %v1785 = vpop.xlane.xlu0 %1784
    %v1786 = vmul.f32 %v1782, %v847
    %v1787 = vmul.f32 %v1785, %v847
    %v1788 = vsub.f32 %v1778, %v1786
    %v1789 = vsub.f32 %v1779, %v1787
    %v1790 = vmul.f32 %v1788, %v1788
    %v1791 = vmul.f32 %v1789, %v1789
    %v1792 = vsel %vm88, %v1790, 0.0
    %1793 = vadd.xlane.f32.xlu0 %v1792
    %v1794 = vpop.xlane.xlu0 %1793
    %v1795 = vsel %vm88, %v1791, 0.0
    %1796 = vadd.xlane.f32.xlu0 %v1795
    %v1797 = vpop.xlane.xlu0 %1796
    %v1798 = vmul.f32 %v1794, %v847
    %v1799 = vmul.f32 %v1797, %v847
    %v1800 = vadd.f32 %v1798, 1e-05
    %v1801 = vadd.f32 %v1799, 1e-05
    %v1802 = vrsqrt.pop %v1800
    %v1803 = vmul.f32 %v1802, %v1800
    %v1804 = vmul.f32 %v1803, %v1802
    %v1805 = vmul.f32 0.5, %v1804
    %v1806 = vsub.f32 1.5, %v1805
    %v1807 = vmul.f32 %v1802, %v1806
    %vm1808 = vweird.f32 %v1800
    %vm1809 = vweird.f32 %v1802
    %vm1810 = vmor %vm1808, %vm1809
    %v1811 = vsel %vm1810, %v1802, %v1807
    %v1812 = vrsqrt.pop %v1801
    %v1813 = vmul.f32 %v1812, %v1801
    %v1814 = vmul.f32 %v1813, %v1812
    %v1815 = vmul.f32 0.5, %v1814
    %v1816 = vsub.f32 1.5, %v1815
    %v1817 = vmul.f32 %v1812, %v1816
    %vm1818 = vweird.f32 %v1801
    %vm1819 = vweird.f32 %v1812
    %vm1820 = vmor %vm1818, %vm1819
    %v1821 = vsel %vm1820, %v1812, %v1817
    %v1822 = vmul.f32 %v1788, %v1811
    %v1823 = vmul.f32 %v1789, %v1821
    %1824 = vst.msk [vmem:[#allocation9] sm:$0xff] %vm88, %v1822
    %1825 = vst.msk [vmem:[#allocation9 + $0x8] sm:$0xff] %vm88, %v1823
    // Predicated region
    $region30: #{tpu_custom_call.1} parent=1 // pred_check
      _
    $region31: #{tpu_custom_call.1} parent=1 // pred_check_branch
      %1827 = sbr.rel (0) target = $region33
    $region32: #{tpu_custom_call.1} parent=1 // pred_region
      %1829 = vsyncadd [#allocation6], 0
      %s1830 = sshll.u32 [#allocation9], 4
      %s1831 = int_to_ptr.vmem [resolvable:$true] %s1830
      %s1832 = sshll.u32 %s6, 4
      %s1833 = int_to_ptr.hbm [resolvable:$true] %s1832
      %1838 = dma.vmem_to_hbm [thread:$0]  %s1831, 256, %s1833, [#allocation6], 128, 128, 8
    $region33: #{tpu_custom_call.1} parent=1 // pred_fallthru
      _
    // Predicated region
    $region34: #{tpu_custom_call.1} parent=1 // pred_check
      _
    $region35: #{tpu_custom_call.1} parent=1 // pred_check_branch
      %1840 = sbr.rel (0) target = $region37
    $region36: #{tpu_custom_call.1} parent=1 // pred_region
      %1842 = dma.done [#allocation6], 256
    $region37: #{tpu_custom_call.1} parent=1 // pred_fallthru
      _
    %1843 = vsyncpa [#allocation5], 1
    %1844 = vsyncpa [#allocation8], 1
    %1845 = vsyncpa [#allocation6], 1

</llo_original>
